<compile_context>
chip_gen: v7x
topology: tpu7x:2x2x1
jax: 0.10.0
libtpu: 0.0.40
codegen_flags: <defaults>
</compile_context>

<pallas_src>
import jax
import jax.numpy as jnp
from jax.experimental import pallas as pl
from jax.experimental.pallas import tpu as pltpu

MARGIN = 10.0


def mkgc_hinge_kernel(hs_p, ts_p, hi_p, ti_p, r_p,
                      hs_n, ts_n, hi_n, ti_n, r_n,
                      out_ref):
    """Per-row hinge = max(0, E_pos - E_neg + margin) for one (tile_n, D) block."""

    def energy(hs, ts, hi, ti, r):
        a1 = hs + r                  # h_s + r
        a2 = hi + r                  # h_i + r
        d1 = a1 - ts                 # ss  : h_s + r - t_s
        d2 = a1 - ti                 # si  : h_s + r - t_i
        d3 = a2 - ts                 # is  : h_i + r - t_s
        d4 = a2 - ti                 # ii  : h_i + r - t_i
        d5 = d1 + (hi - ti)          # sisi: h_s + h_i + r - (t_s + t_i)
        tot = (jnp.abs(d1) + jnp.abs(d2) + jnp.abs(d3)
               + jnp.abs(d4) + jnp.abs(d5))
        # single cross-lane reduction per side (sum of L1 sums == sum of the sum)
        return jnp.sum(tot, axis=1, keepdims=True)

    e_pos = energy(hs_p[...], ts_p[...], hi_p[...], ti_p[...], r_p[...])
    e_neg = energy(hs_n[...], ts_n[...], hi_n[...], ti_n[...], r_n[...])

    # margin_ranking_loss with y = -1  ->  max(0, (pos - neg) + margin)
    out_ref[...] = jnp.maximum(e_pos - e_neg + MARGIN, 0.0)


def _choose_tile_n(len_pos, d, max_tile=512, vmem_budget=48 * 1024 * 1024):
    """Largest multiple-of-8 divisor of len_pos that fits the VMEM budget.

    Budget covers the 10 double-buffered f32 input blocks of shape (tile_n, d)
    (the (tile_n, 1) output double-buffer is negligible).
    """
    cap = vmem_budget // (10 * d * 4 * 2)
    cap = max(8, min(int(max_tile), int(cap), int(len_pos)))
    for t in range(cap, 7, -1):
        if len_pos % t == 0 and t % 8 == 0:
            return t
    raise ValueError(f"len_pos={len_pos} must have a multiple-of-8 divisor")


def mkgc_loss_pallas(pos_g, neg_g, *, tile_n, len_pos, neg_num):
    """pos_g: 5 arrays (len_pos, D); neg_g: 5 arrays (neg_num*len_pos, D)."""
    d = pos_g[0].shape[1]
    n_neg = neg_g[0].shape[0]
    assert n_neg == neg_num * len_pos
    assert len_pos % tile_n == 0 and tile_n % 8 == 0 and d % 128 == 0

    pos_blocks = len_pos // tile_n

    # Grid: axis 0 = positive block, axis 1 = negative repetition (innermost).
    # The pos block index (i, 0) is constant along axis 1, so the pipeline
    # skips re-DMAing the resident positive tiles between consecutive steps.
    # Neg/output row n = (j*pos_blocks + i)*tile_n + r pairs with pos row
    # i*tile_n + r == n % len_pos, exactly matching pos_triples.repeat(neg_num, 1).
    pos_spec = pl.BlockSpec((tile_n, d), lambda i, j: (i, 0))
    neg_spec = pl.BlockSpec((tile_n, d), lambda i, j: (j * pos_blocks + i, 0))
    out_spec = pl.BlockSpec((tile_n, 1), lambda i, j: (j * pos_blocks + i, 0))

    # Double-buffered inputs + output + slack; explicit so v5e's 16 MiB default
    # scoped VMEM doesn't reject large tiles, capped under v7x's 64 MiB.
    vmem_needed = 2 * (10 * tile_n * d * 4 + tile_n * 4)
    vmem_limit = int(min(64 * 1024 * 1024,
                         max(32 * 1024 * 1024, vmem_needed * 3 // 2)))

    # Advisory cost hint (memory-bound: ~10*N*D f32 read once).
    cost = pl.CostEstimate(
        flops=2 * 18 * d * n_neg,
        transcendentals=0,
        bytes_accessed=4 * d * (5 * len_pos + 5 * n_neg) + 4 * n_neg,
    )

    hinge = pl.pallas_call(
        mkgc_hinge_kernel,
        out_shape=jax.ShapeDtypeStruct((n_neg, 1), jnp.float32),
        grid_spec=pltpu.PrefetchScalarGridSpec(
            num_scalar_prefetch=0,
            grid=(pos_blocks, neg_num),
            in_specs=[pos_spec] * 5 + [neg_spec] * 5,
            out_specs=out_spec,
        ),
        compiler_params=pltpu.CompilerParams(
            # every output block is written exactly once -> both axes parallel
            # (megacore may split the neg axis on v7x even when pos_blocks == 1).
            dimension_semantics=("parallel", "parallel"),
            vmem_limit_bytes=vmem_limit),
        cost_estimate=cost,
    )(*pos_g, *neg_g)

    # final reduction + mean over the neg_num*len_pos rows in plain JAX
    return jnp.sum(hinge) / n_neg


def mkgc_forward(params, batch_inputs, neg_num, *, max_tile_n=512):
    ent_emb, rel_emb, img_emb = params
    n_total = batch_inputs.shape[0]
    len_pos = n_total // (neg_num + 1)
    pos = batch_inputs[:len_pos]
    neg = batch_inputs[len_pos:]
    assert neg.shape[0] == neg_num * len_pos
    assert len_pos % 8 == 0, "len_pos must be a multiple of 8 (no padding path)"
    d = ent_emb.shape[1]
    assert d % 128 == 0 and img_emb.shape[1] == d and rel_emb.shape[1] == d

    tile_n = _choose_tile_n(len_pos, d, max_tile=max_tile_n)

    # Gather ONLY the len_pos unique positive rows (no neg_num-fold tiling);
    # the kernel's index_map replays them against every negative block.
    g = lambda tbl, idx: jnp.take(tbl, idx, axis=0)
    pos_g = (g(ent_emb, pos[:, 0]), g(ent_emb, pos[:, 2]),
             g(img_emb, pos[:, 0]), g(img_emb, pos[:, 2]),
             g(rel_emb, pos[:, 1]))
    neg_g = (g(ent_emb, neg[:, 0]), g(ent_emb, neg[:, 2]),
             g(img_emb, neg[:, 0]), g(img_emb, neg[:, 2]),
             g(rel_emb, neg[:, 1]))
    return mkgc_loss_pallas(pos_g, neg_g, tile_n=tile_n,
                            len_pos=len_pos, neg_num=neg_num)


def mkgc_forward_ref(params, batch_inputs, neg_num):
    """Pure-JAX reference of the PyTorch forward (for correctness check)."""
    ent_emb, rel_emb, img_emb = params
    n_total = batch_inputs.shape[0]
    len_pos = n_total // (neg_num + 1)
    pos = jnp.tile(batch_inputs[:len_pos], (neg_num, 1))
    neg = batch_inputs[len_pos:]

    def energies(triples):
        hs = jnp.take(ent_emb, triples[:, 0], axis=0)
        ts = jnp.take(ent_emb, triples[:, 2], axis=0)
        hi = jnp.take(img_emb, triples[:, 0], axis=0)
        ti = jnp.take(img_emb, triples[:, 2], axis=0)
        r = jnp.take(rel_emb, triples[:, 1], axis=0)
        e = lambda h, t: jnp.sum(jnp.abs(h + r - t), axis=1)
        return e(hs, ts) + e(hs, ti) + e(hi, ts) + e(hi, ti) + e(hs + hi, ts + ti)

    e_pos, e_neg = energies(pos), energies(neg)
    return jnp.mean(jnp.maximum(e_pos - e_neg + MARGIN, 0.0))


def xavier_normal(key, shape):
    std = (2.0 / (shape[0] + shape[1])) ** 0.5
    return std * jax.random.normal(key, shape, dtype=jnp.float32)


def make_params(key, num_entities, num_relations, dim, r_dim):
    k_ent, k_rel, k_img, k_txt = jax.random.split(key, 4)
    ent_emb = xavier_normal(k_ent, (num_entities, 2 * dim))
    rel_emb = xavier_normal(k_rel, (num_relations, 2 * r_dim))

    # img_entity_embeddings: AvgPool2d(4,4) on (E,64,64) -> (E,16,16) -> 256 feats
    img_raw = jax.random.normal(k_img, (num_entities, 64, 64), dtype=jnp.float32)
    img_pooled = img_raw.reshape(num_entities, 16, 4, 16, 4).mean(axis=(2, 4))
    img_flat = img_pooled.reshape(num_entities, 256)
    # AdaptiveAvgPool2d((4,64)) on (E,12,64): avg groups of 3 rows -> (E,4,64) -> 256
    desp_raw = jax.random.normal(k_txt, (num_entities, 12, 64), dtype=jnp.float32)
    txt_pooled = desp_raw.reshape(num_entities, 4, 3, 64).mean(axis=2)
    txt_flat = txt_pooled.reshape(num_entities, 256)
    img_emb = jnp.concatenate([img_flat, txt_flat], axis=1)     # (E, 512)
    return ent_emb, rel_emb, img_emb


if __name__ == "__main__":
    # small config consistent with the module: 2*dim must equal the 512-d
    # multimodal embedding (256 img + 256 txt features per entity).
    num_entities, num_relations = 10, 5
    dim = r_dim = 256                 # -> embedding width D = 512
    neg_num, len_pos = 2, 32          # batch = (neg_num+1)*len_pos = 96 triples

    key = jax.random.PRNGKey(0)
    k_params, k_h, k_r, k_t = jax.random.split(key, 4)
    params = make_params(k_params, num_entities, num_relations, dim, r_dim)

    n_batch = (neg_num + 1) * len_pos
    heads = jax.random.randint(k_h, (n_batch,), 0, num_entities)
    rels = jax.random.randint(k_r, (n_batch,), 0, num_relations)
    tails = jax.random.randint(k_t, (n_batch,), 0, num_entities)
    batch_inputs = jnp.stack([heads, rels, tails], axis=1).astype(jnp.int32)

    loss_ref = jax.block_until_ready(mkgc_forward_ref(params, batch_inputs, neg_num))

    # default path: tile covers all pos rows in one block (grid = (1, neg_num))
    loss_big = jax.block_until_ready(mkgc_forward(params, batch_inputs, neg_num))
    assert jnp.allclose(loss_big, loss_ref, rtol=1e-4, atol=1e-3), (loss_big, loss_ref)

    # multi-block path: force tile_n=16 so pos_blocks=2, grid=(2, 2) — exercises
    # the de-duplicated pos index_map pairing across the 2-D grid.
    loss_small = jax.block_until_ready(
        mkgc_forward(params, batch_inputs, neg_num, max_tile_n=16))
    assert jnp.allclose(loss_small, loss_ref, rtol=1e-4, atol=1e-3), (loss_small, loss_ref)

    print("KERNEL_OK")
</pallas_src>

<mosaic_0001>
module attributes {stable_mosaic.version = 11 : i64} {
  func.func @mkgc_hinge_kernel(%arg0: i32, %arg1: i32, %arg2: memref<32x512xf32, #tpu.memory_space<vmem>>, %arg3: memref<32x512xf32, #tpu.memory_space<vmem>>, %arg4: memref<32x512xf32, #tpu.memory_space<vmem>>, %arg5: memref<32x512xf32, #tpu.memory_space<vmem>>, %arg6: memref<32x512xf32, #tpu.memory_space<vmem>>, %arg7: memref<32x512xf32, #tpu.memory_space<vmem>>, %arg8: memref<32x512xf32, #tpu.memory_space<vmem>>, %arg9: memref<32x512xf32, #tpu.memory_space<vmem>>, %arg10: memref<32x512xf32, #tpu.memory_space<vmem>>, %arg11: memref<32x512xf32, #tpu.memory_space<vmem>>, %arg12: memref<32x1xf32, #tpu.memory_space<vmem>>) attributes {dimension_semantics = [#tpu.dimension_semantics<parallel>, #tpu.dimension_semantics<parallel>], iteration_bounds = array<i64: 1, 2>, scalar_prefetch = 0 : i64, scratch_operands = 0 : i64, tpu.core_type = #tpu.core_type<tc>, window_params = [{transform_indices = @transform_0, window_bounds = array<i64: 32, 512>}, {transform_indices = @transform_1, window_bounds = array<i64: 32, 512>}, {transform_indices = @transform_2, window_bounds = array<i64: 32, 512>}, {transform_indices = @transform_3, window_bounds = array<i64: 32, 512>}, {transform_indices = @transform_4, window_bounds = array<i64: 32, 512>}, {transform_indices = @transform_5, window_bounds = array<i64: 32, 512>}, {transform_indices = @transform_6, window_bounds = array<i64: 32, 512>}, {transform_indices = @transform_7, window_bounds = array<i64: 32, 512>}, {transform_indices = @transform_8, window_bounds = array<i64: 32, 512>}, {transform_indices = @transform_9, window_bounds = array<i64: 32, 512>}, {transform_indices = @transform_10, window_bounds = array<i64: 32, 1>}]} {
    %c0 = arith.constant 0 : index
    %c0_0 = arith.constant 0 : index
    %0 = vector.load %arg2[%c0, %c0_0] : memref<32x512xf32, #tpu.memory_space<vmem>>, vector<32x512xf32>
    %c0_1 = arith.constant 0 : index
    %c0_2 = arith.constant 0 : index
    %1 = vector.load %arg3[%c0_1, %c0_2] : memref<32x512xf32, #tpu.memory_space<vmem>>, vector<32x512xf32>
    %c0_3 = arith.constant 0 : index
    %c0_4 = arith.constant 0 : index
    %2 = vector.load %arg4[%c0_3, %c0_4] : memref<32x512xf32, #tpu.memory_space<vmem>>, vector<32x512xf32>
    %c0_5 = arith.constant 0 : index
    %c0_6 = arith.constant 0 : index
    %3 = vector.load %arg5[%c0_5, %c0_6] : memref<32x512xf32, #tpu.memory_space<vmem>>, vector<32x512xf32>
    %c0_7 = arith.constant 0 : index
    %c0_8 = arith.constant 0 : index
    %4 = vector.load %arg6[%c0_7, %c0_8] : memref<32x512xf32, #tpu.memory_space<vmem>>, vector<32x512xf32>
    %5 = arith.addf %0, %4 : vector<32x512xf32>
    %6 = arith.addf %2, %4 : vector<32x512xf32>
    %7 = arith.subf %5, %1 : vector<32x512xf32>
    %8 = arith.subf %5, %3 : vector<32x512xf32>
    %9 = arith.subf %6, %1 : vector<32x512xf32>
    %10 = arith.subf %6, %3 : vector<32x512xf32>
    %11 = arith.subf %2, %3 : vector<32x512xf32>
    %12 = arith.addf %7, %11 : vector<32x512xf32>
    %13 = math.absf %7 : vector<32x512xf32>
    %14 = math.absf %8 : vector<32x512xf32>
    %15 = arith.addf %13, %14 : vector<32x512xf32>
    %16 = math.absf %9 : vector<32x512xf32>
    %17 = arith.addf %15, %16 : vector<32x512xf32>
    %18 = math.absf %10 : vector<32x512xf32>
    %19 = arith.addf %17, %18 : vector<32x512xf32>
    %20 = math.absf %12 : vector<32x512xf32>
    %21 = arith.addf %19, %20 : vector<32x512xf32>
    %cst = arith.constant dense<0.000000e+00> : vector<32xf32>
    %22 = vector.multi_reduction <add>, %21, %cst [1] : vector<32x512xf32> to vector<32xf32>
    %23 = vector.shape_cast %22 : vector<32xf32> to vector<32x1xf32>
    %c0_9 = arith.constant 0 : index
    %c0_10 = arith.constant 0 : index
    %24 = vector.load %arg7[%c0_9, %c0_10] : memref<32x512xf32, #tpu.memory_space<vmem>>, vector<32x512xf32>
    %c0_11 = arith.constant 0 : index
    %c0_12 = arith.constant 0 : index
    %25 = vector.load %arg8[%c0_11, %c0_12] : memref<32x512xf32, #tpu.memory_space<vmem>>, vector<32x512xf32>
    %c0_13 = arith.constant 0 : index
    %c0_14 = arith.constant 0 : index
    %26 = vector.load %arg9[%c0_13, %c0_14] : memref<32x512xf32, #tpu.memory_space<vmem>>, vector<32x512xf32>
    %c0_15 = arith.constant 0 : index
    %c0_16 = arith.constant 0 : index
    %27 = vector.load %arg10[%c0_15, %c0_16] : memref<32x512xf32, #tpu.memory_space<vmem>>, vector<32x512xf32>
    %c0_17 = arith.constant 0 : index
    %c0_18 = arith.constant 0 : index
    %28 = vector.load %arg11[%c0_17, %c0_18] : memref<32x512xf32, #tpu.memory_space<vmem>>, vector<32x512xf32>
    %29 = arith.addf %24, %28 : vector<32x512xf32>
    %30 = arith.addf %26, %28 : vector<32x512xf32>
    %31 = arith.subf %29, %25 : vector<32x512xf32>
    %32 = arith.subf %29, %27 : vector<32x512xf32>
    %33 = arith.subf %30, %25 : vector<32x512xf32>
    %34 = arith.subf %30, %27 : vector<32x512xf32>
    %35 = arith.subf %26, %27 : vector<32x512xf32>
    %36 = arith.addf %31, %35 : vector<32x512xf32>
    %37 = math.absf %31 : vector<32x512xf32>
    %38 = math.absf %32 : vector<32x512xf32>
    %39 = arith.addf %37, %38 : vector<32x512xf32>
    %40 = math.absf %33 : vector<32x512xf32>
    %41 = arith.addf %39, %40 : vector<32x512xf32>
    %42 = math.absf %34 : vector<32x512xf32>
    %43 = arith.addf %41, %42 : vector<32x512xf32>
    %44 = math.absf %36 : vector<32x512xf32>
    %45 = arith.addf %43, %44 : vector<32x512xf32>
    %cst_19 = arith.constant dense<0.000000e+00> : vector<32xf32>
    %46 = vector.multi_reduction <add>, %45, %cst_19 [1] : vector<32x512xf32> to vector<32xf32>
    %47 = vector.shape_cast %46 : vector<32xf32> to vector<32x1xf32>
    %48 = arith.subf %23, %47 : vector<32x1xf32>
    %cst_20 = arith.constant 1.000000e+01 : f32
    %49 = vector.broadcast %cst_20 : f32 to vector<32x1xf32>
    %50 = arith.addf %48, %49 : vector<32x1xf32>
    %cst_21 = arith.constant 0.000000e+00 : f32
    %51 = vector.broadcast %cst_21 : f32 to vector<32x1xf32>
    %52 = arith.maximumf %50, %51 : vector<32x1xf32>
    %c0_22 = arith.constant 0 : index
    %c0_23 = arith.constant 0 : index
    %53 = vector.load %arg12[%c0_22, %c0_23] : memref<32x1xf32, #tpu.memory_space<vmem>>, vector<32x1xf32>
    tpu.vector_store %arg12[%c0_22, %c0_23], %52 {strides = array<i32>} : memref<32x1xf32, #tpu.memory_space<vmem>>, vector<32x1xf32>,
    return
  }
  func.func @transform_0(%arg0: i32, %arg1: i32) -> (i32, i32) {
    %c0_i32 = arith.constant 0 : i32
    %c0_i32_0 = arith.constant 0 : i32
    return %arg0, %c0_i32 : i32, i32
  }
  func.func @transform_1(%arg0: i32, %arg1: i32) -> (i32, i32) {
    %c0_i32 = arith.constant 0 : i32
    %c0_i32_0 = arith.constant 0 : i32
    return %arg0, %c0_i32 : i32, i32
  }
  func.func @transform_2(%arg0: i32, %arg1: i32) -> (i32, i32) {
    %c0_i32 = arith.constant 0 : i32
    %c0_i32_0 = arith.constant 0 : i32
    return %arg0, %c0_i32 : i32, i32
  }
  func.func @transform_3(%arg0: i32, %arg1: i32) -> (i32, i32) {
    %c0_i32 = arith.constant 0 : i32
    %c0_i32_0 = arith.constant 0 : i32
    return %arg0, %c0_i32 : i32, i32
  }
  func.func @transform_4(%arg0: i32, %arg1: i32) -> (i32, i32) {
    %c0_i32 = arith.constant 0 : i32
    %c0_i32_0 = arith.constant 0 : i32
    return %arg0, %c0_i32 : i32, i32
  }
  func.func @transform_5(%arg0: i32, %arg1: i32) -> (i32, i32) {
    %c1_i32 = arith.constant 1 : i32
    %0 = arith.muli %arg1, %c1_i32 : i32
    %1 = arith.addi %0, %arg0 : i32
    %c0_i32 = arith.constant 0 : i32
    %c0_i32_0 = arith.constant 0 : i32
    return %1, %c0_i32 : i32, i32
  }
  func.func @transform_6(%arg0: i32, %arg1: i32) -> (i32, i32) {
    %c1_i32 = arith.constant 1 : i32
    %0 = arith.muli %arg1, %c1_i32 : i32
    %1 = arith.addi %0, %arg0 : i32
    %c0_i32 = arith.constant 0 : i32
    %c0_i32_0 = arith.constant 0 : i32
    return %1, %c0_i32 : i32, i32
  }
  func.func @transform_7(%arg0: i32, %arg1: i32) -> (i32, i32) {
    %c1_i32 = arith.constant 1 : i32
    %0 = arith.muli %arg1, %c1_i32 : i32
    %1 = arith.addi %0, %arg0 : i32
    %c0_i32 = arith.constant 0 : i32
    %c0_i32_0 = arith.constant 0 : i32
    return %1, %c0_i32 : i32, i32
  }
  func.func @transform_8(%arg0: i32, %arg1: i32) -> (i32, i32) {
    %c1_i32 = arith.constant 1 : i32
    %0 = arith.muli %arg1, %c1_i32 : i32
    %1 = arith.addi %0, %arg0 : i32
    %c0_i32 = arith.constant 0 : i32
    %c0_i32_0 = arith.constant 0 : i32
    return %1, %c0_i32 : i32, i32
  }
  func.func @transform_9(%arg0: i32, %arg1: i32) -> (i32, i32) {
    %c1_i32 = arith.constant 1 : i32
    %0 = arith.muli %arg1, %c1_i32 : i32
    %1 = arith.addi %0, %arg0 : i32
    %c0_i32 = arith.constant 0 : i32
    %c0_i32_0 = arith.constant 0 : i32
    return %1, %c0_i32 : i32, i32
  }
  func.func @transform_10(%arg0: i32, %arg1: i32) -> (i32, i32) {
    %c1_i32 = arith.constant 1 : i32
    %0 = arith.muli %arg1, %c1_i32 : i32
    %1 = arith.addi %0, %arg0 : i32
    %c0_i32 = arith.constant 0 : i32
    %c0_i32_0 = arith.constant 0 : i32
    return %1, %c0_i32 : i32, i32
  }
}

</mosaic_0001>

<llo_original>
// kernel: tpu_custom_call.1
$region0: #{tpu_custom_call.1}
  #allocation0 [shape = 'u32[]', space=smem, size = 0x4, offset = 0x4, fixed_abs, tag = 'smem constant byte address 0x4 - core index']
  #allocation1 [shape = 'u32[144,128]{1,0:T(1,128)}', space=vmem, size = 0x12000, scoped, tag = 'internal scratch']
  %s0 = inlined_call_operand.hbm [shape: f32[32,512], index: 0, kind: input, shape index: {}]
  %s1 = inlined_call_operand.hbm [shape: f32[32,512], index: 1, kind: input, shape index: {}]
  %s2 = inlined_call_operand.hbm [shape: f32[32,512], index: 2, kind: input, shape index: {}]
  %s3 = inlined_call_operand.hbm [shape: f32[32,512], index: 3, kind: input, shape index: {}]
  %s4 = inlined_call_operand.hbm [shape: f32[32,512], index: 4, kind: input, shape index: {}]
  %s5 = inlined_call_operand.hbm [shape: f32[64,512], index: 5, kind: input, shape index: {}]
  %s6 = inlined_call_operand.hbm [shape: f32[64,512], index: 6, kind: input, shape index: {}]
  %s7 = inlined_call_operand.hbm [shape: f32[64,512], index: 7, kind: input, shape index: {}]
  %s8 = inlined_call_operand.hbm [shape: f32[64,512], index: 8, kind: input, shape index: {}]
  %s9 = inlined_call_operand.hbm [shape: f32[64,512], index: 9, kind: input, shape index: {}]
  %s10 = inlined_call_operand.vmem [shape: f32[64,1], index: 10, kind: output, shape index: {}]
  %s11 = sld [smem:[#allocation0]]
  $region113: #{tpu_custom_call.1} parent=0
    _
  %s13 = ssub.s32 1, %s11
  %s14 = scalar_select 0, %s13, %s11
  $region1: #{tpu_custom_call.1} parent=0
    #allocation2 [shape = 'u8[65536]{0}', space=vmem, size = 0x10000, scoped, tag = 'input window, operand 0, single buffered']
    #allocation3 [shape = 's32[2]{0}', space=sflag, size = 0x8, scoped, tag = 'scoped memory for tpu_custom_call.1']
    #allocation4 [shape = 'u8[65536]{0}', space=vmem, size = 0x10000, scoped, tag = 'input window, operand 1, single buffered']
    #allocation5 [shape = 's32[1]{0}', space=sflag, size = 0x4, scoped, tag = 'scoped memory for tpu_custom_call.1']
    #allocation6 [shape = 'u8[65536]{0}', space=vmem, size = 0x10000, scoped, tag = 'input window, operand 2, single buffered']
    #allocation7 [shape = 'u8[65536]{0}', space=vmem, size = 0x10000, scoped, tag = 'input window, operand 3, single buffered']
    #allocation8 [shape = 's32[1]{0}', space=sflag, size = 0x4, scoped, tag = 'scoped memory for tpu_custom_call.1']
    #allocation9 [shape = 'u8[65536]{0}', space=vmem, size = 0x10000, scoped, tag = 'input window, operand 4, single buffered']
    #allocation10 [shape = 'u8[131072]{0}', space=vmem, size = 0x20000, scoped, tag = 'input window, operand 5']
    #allocation11 [shape = 's32[2]{0}', space=sflag, size = 0x8, scoped, tag = 'scoped memory for tpu_custom_call.1']
    #allocation12 [shape = 'u8[131072]{0}', space=vmem, size = 0x20000, scoped, tag = 'input window, operand 6']
    #allocation13 [shape = 'u8[131072]{0}', space=vmem, size = 0x20000, scoped, tag = 'input window, operand 7']
    #allocation14 [shape = 's32[2]{0}', space=sflag, size = 0x8, scoped, tag = 'scoped memory for tpu_custom_call.1']
    #allocation15 [shape = 'u8[131072]{0}', space=vmem, size = 0x20000, scoped, tag = 'input window, operand 8']
    #allocation16 [shape = 'u8[131072]{0}', space=vmem, size = 0x20000, scoped, tag = 'input window, operand 9']
    #allocation17 [shape = 's32[2]{0}', space=sflag, size = 0x8, scoped, tag = 'scoped memory for tpu_custom_call.1']
    %15 = vsyncpa [#allocation3], 0
    %16 = vsyncpa [#allocation5], 0
    %17 = vsyncpa [#allocation8], 0
    %18 = vsyncpa [#allocation11], 0
    %s19 = scalar_lea.sflag [#allocation11], 1
    %20 = vsyncpa %s19, 0
    %21 = vsyncpa [#allocation14], 0
    %s22 = scalar_lea.sflag [#allocation14], 1
    %23 = vsyncpa %s22, 0
    %24 = vsyncpa [#allocation17], 0
    %s25 = scalar_lea.sflag [#allocation17], 1
    %26 = vsyncpa %s25, 0
    loop: start=0, step=1, limit=4
    $region2: #{tpu_custom_call.1} parent=1 // loop_pre_header
      _
    $region3: #{tpu_custom_call.1} parent=1 // loop_header
      %s28 = sphi 0, %s32
      %p29 = scmp.ge.s32.totalorder %s28, 4
      %s35 = sphi 0, %s47
      %s36 = sphi 0, %s43
      %s37 = sphi 0, %s35
      %s38 = sphi 0, %s36
      %s39 = sphi 0, %s37
      %s40 = sphi 0, %s38
      %s50 = sphi 0, %s52
      %s53 = sphi 0, %s50
      %s54 = sphi 0, %s53
      %s70 = sphi 0, %s54
      %s76 = sphi 0, %s78
      %s79 = sphi 0, %s76
      %s80 = sphi 0, %s79
      %s96 = sphi 0, %s80
      %s102 = sphi 0, %s104
      %s105 = sphi 0, %s102
      %s106 = sphi 0, %s105
      %s122 = sphi 0, %s106
      %s128 = sphi 0, %s130
      %s131 = sphi 0, %s128
      %s132 = sphi 0, %s131
      %s148 = sphi 0, %s132
      %s154 = sphi 0, %s156
      %s157 = sphi 0, %s154
      %s158 = sphi 0, %s157
      %s174 = sphi 0, %s158
      %s182 = sphi 0, %s184
      %s185 = sphi 0, %s182
      %s186 = sphi 0, %s185
      %s202 = sphi 0, %s186
      %s210 = sphi 0, %s212
      %s213 = sphi 0, %s210
      %s214 = sphi 0, %s213
      %s230 = sphi 0, %s214
      %s238 = sphi 0, %s240
      %s241 = sphi 0, %s238
      %s242 = sphi 0, %s241
      %s258 = sphi 0, %s242
      %s266 = sphi 0, %s268
      %s269 = sphi 0, %s266
      %s270 = sphi 0, %s269
      %s286 = sphi 0, %s270
      %s294 = sphi 0, %s296
      %s297 = sphi 0, %s294
      %s298 = sphi 0, %s297
      %s314 = sphi 0, %s298
      %s322 = sphi 0, %s324
      %s325 = sphi 0, %s322
      %s326 = sphi 0, %s325
      %s342 = sphi 0, %s326
    $region4: #{tpu_custom_call.1} parent=1 // loop_header_branch
      %31 = sbr.rel (%p29) target = $region8
    $region5: #{tpu_custom_call.1} parent=1 // loop_body
      %s33 = ssub.s32 %s28, 1
      %s34 = ssub.s32 %s28, 2
      %s41 = sadd.s32 1, %s36
      %p42 = scmp.ge.s32.totalorder %s41, 2
      %s43 = scalar_select %p42, 0, %s41
      %s44 = sadd.s32 1, %s35
      %s45 = scalar_select %p42, %s44, %s35
      %p46 = scmp.ge.s32.totalorder %s45, 1
      %s47 = scalar_select %p46, 0, %s45
      %s48 = ssub.s32 %s35, %s47
      %p49 = scmp.eq.s32.totalorder %s48, 0
      %s51 = sadd.s32 %s50, 1
      %s52 = scalar_select %p49, %s50, %s51
      %p55 = pneg %p49
      %p56 = scmp.eq.s32.totalorder %s28, 1
      %p57 = por %p55, %p56
      %p58 = scmp.ne.s32.totalorder %s50, %s53
      %p59 = scmp.eq.s32.totalorder %s28, 0
      %p60 = por %p58, %p59
      %p61 = scmp.ne.s32.totalorder %s50, %s53
      %p62 = scmp.eq.s32.totalorder %s33, 1
      %p63 = por %p61, %p62
      %p64 = scmp.ne.s32.totalorder %s53, %s54
      %p65 = scmp.eq.s32.totalorder %s33, 0
      %p66 = por %p64, %p65
      %p67 = scmp.ne.s32.totalorder %s53, %s54
      %p68 = scmp.eq.s32.totalorder %s34, 1
      %p69 = por %p67, %p68
      %p71 = scmp.ne.s32.totalorder %s54, %s70
      %p72 = scmp.eq.s32.totalorder %s34, 0
      %p73 = por %p71, %p72
      %s74 = ssub.s32 %s35, %s47
      %p75 = scmp.eq.s32.totalorder %s74, 0
      %s77 = sadd.s32 %s76, 1
      %s78 = scalar_select %p75, %s76, %s77
      %p81 = pneg %p75
      %p82 = scmp.eq.s32.totalorder %s28, 1
      %p83 = por %p81, %p82
      %p84 = scmp.ne.s32.totalorder %s76, %s79
      %p85 = scmp.eq.s32.totalorder %s28, 0
      %p86 = por %p84, %p85
      %p87 = scmp.ne.s32.totalorder %s76, %s79
      %p88 = scmp.eq.s32.totalorder %s33, 1
      %p89 = por %p87, %p88
      %p90 = scmp.ne.s32.totalorder %s79, %s80
      %p91 = scmp.eq.s32.totalorder %s33, 0
      %p92 = por %p90, %p91
      %p93 = scmp.ne.s32.totalorder %s79, %s80
      %p94 = scmp.eq.s32.totalorder %s34, 1
      %p95 = por %p93, %p94
      %p97 = scmp.ne.s32.totalorder %s80, %s96
      %p98 = scmp.eq.s32.totalorder %s34, 0
      %p99 = por %p97, %p98
      %s100 = ssub.s32 %s35, %s47
      %p101 = scmp.eq.s32.totalorder %s100, 0
      %s103 = sadd.s32 %s102, 1
      %s104 = scalar_select %p101, %s102, %s103
      %p107 = pneg %p101
      %p108 = scmp.eq.s32.totalorder %s28, 1
      %p109 = por %p107, %p108
      %p110 = scmp.ne.s32.totalorder %s102, %s105
      %p111 = scmp.eq.s32.totalorder %s28, 0
      %p112 = por %p110, %p111
      %p113 = scmp.ne.s32.totalorder %s102, %s105
      %p114 = scmp.eq.s32.totalorder %s33, 1
      %p115 = por %p113, %p114
      %p116 = scmp.ne.s32.totalorder %s105, %s106
      %p117 = scmp.eq.s32.totalorder %s33, 0
      %p118 = por %p116, %p117
      %p119 = scmp.ne.s32.totalorder %s105, %s106
      %p120 = scmp.eq.s32.totalorder %s34, 1
      %p121 = por %p119, %p120
      %p123 = scmp.ne.s32.totalorder %s106, %s122
      %p124 = scmp.eq.s32.totalorder %s34, 0
      %p125 = por %p123, %p124
      %s126 = ssub.s32 %s35, %s47
      %p127 = scmp.eq.s32.totalorder %s126, 0
      %s129 = sadd.s32 %s128, 1
      %s130 = scalar_select %p127, %s128, %s129
      %p133 = pneg %p127
      %p134 = scmp.eq.s32.totalorder %s28, 1
      %p135 = por %p133, %p134
      %p136 = scmp.ne.s32.totalorder %s128, %s131
      %p137 = scmp.eq.s32.totalorder %s28, 0
      %p138 = por %p136, %p137
      %p139 = scmp.ne.s32.totalorder %s128, %s131
      %p140 = scmp.eq.s32.totalorder %s33, 1
      %p141 = por %p139, %p140
      %p142 = scmp.ne.s32.totalorder %s131, %s132
      %p143 = scmp.eq.s32.totalorder %s33, 0
      %p144 = por %p142, %p143
      %p145 = scmp.ne.s32.totalorder %s131, %s132
      %p146 = scmp.eq.s32.totalorder %s34, 1
      %p147 = por %p145, %p146
      %p149 = scmp.ne.s32.totalorder %s132, %s148
      %p150 = scmp.eq.s32.totalorder %s34, 0
      %p151 = por %p149, %p150
      %s152 = ssub.s32 %s35, %s47
      %p153 = scmp.eq.s32.totalorder %s152, 0
      %s155 = sadd.s32 %s154, 1
      %s156 = scalar_select %p153, %s154, %s155
      %p159 = pneg %p153
      %p160 = scmp.eq.s32.totalorder %s28, 1
      %p161 = por %p159, %p160
      %p162 = scmp.ne.s32.totalorder %s154, %s157
      %p163 = scmp.eq.s32.totalorder %s28, 0
      %p164 = por %p162, %p163
      %p165 = scmp.ne.s32.totalorder %s154, %s157
      %p166 = scmp.eq.s32.totalorder %s33, 1
      %p167 = por %p165, %p166
      %p168 = scmp.ne.s32.totalorder %s157, %s158
      %p169 = scmp.eq.s32.totalorder %s33, 0
      %p170 = por %p168, %p169
      %p171 = scmp.ne.s32.totalorder %s157, %s158
      %p172 = scmp.eq.s32.totalorder %s34, 1
      %p173 = por %p171, %p172
      %p175 = scmp.ne.s32.totalorder %s158, %s174
      %p176 = scmp.eq.s32.totalorder %s34, 0
      %p177 = por %p175, %p176
      %s178 = sadd.s32 %s36, %s35
      %s179 = sadd.s32 %s43, %s47
      %s180 = ssub.s32 %s178, %s179
      %p181 = scmp.eq.s32.totalorder %s180, 0
      %s183 = sadd.s32 %s182, 1
      %s184 = scalar_select %p181, %s182, %s183
      %p187 = pneg %p181
      %p188 = scmp.eq.s32.totalorder %s28, 1
      %p189 = por %p187, %p188
      %p190 = scmp.ne.s32.totalorder %s182, %s185
      %p191 = scmp.eq.s32.totalorder %s28, 0
      %p192 = por %p190, %p191
      %p193 = scmp.ne.s32.totalorder %s182, %s185
      %p194 = scmp.eq.s32.totalorder %s33, 1
      %p195 = por %p193, %p194
      %p196 = scmp.ne.s32.totalorder %s185, %s186
      %p197 = scmp.eq.s32.totalorder %s33, 0
      %p198 = por %p196, %p197
      %p199 = scmp.ne.s32.totalorder %s185, %s186
      %p200 = scmp.eq.s32.totalorder %s34, 1
      %p201 = por %p199, %p200
      %p203 = scmp.ne.s32.totalorder %s186, %s202
      %p204 = scmp.eq.s32.totalorder %s34, 0
      %p205 = por %p203, %p204
      %s206 = sadd.s32 %s36, %s35
      %s207 = sadd.s32 %s43, %s47
      %s208 = ssub.s32 %s206, %s207
      %p209 = scmp.eq.s32.totalorder %s208, 0
      %s211 = sadd.s32 %s210, 1
      %s212 = scalar_select %p209, %s210, %s211
      %p215 = pneg %p209
      %p216 = scmp.eq.s32.totalorder %s28, 1
      %p217 = por %p215, %p216
      %p218 = scmp.ne.s32.totalorder %s210, %s213
      %p219 = scmp.eq.s32.totalorder %s28, 0
      %p220 = por %p218, %p219
      %p221 = scmp.ne.s32.totalorder %s210, %s213
      %p222 = scmp.eq.s32.totalorder %s33, 1
      %p223 = por %p221, %p222
      %p224 = scmp.ne.s32.totalorder %s213, %s214
      %p225 = scmp.eq.s32.totalorder %s33, 0
      %p226 = por %p224, %p225
      %p227 = scmp.ne.s32.totalorder %s213, %s214
      %p228 = scmp.eq.s32.totalorder %s34, 1
      %p229 = por %p227, %p228
      %p231 = scmp.ne.s32.totalorder %s214, %s230
      %p232 = scmp.eq.s32.totalorder %s34, 0
      %p233 = por %p231, %p232
      %s234 = sadd.s32 %s36, %s35
      %s235 = sadd.s32 %s43, %s47
      %s236 = ssub.s32 %s234, %s235
      %p237 = scmp.eq.s32.totalorder %s236, 0
      %s239 = sadd.s32 %s238, 1
      %s240 = scalar_select %p237, %s238, %s239
      %p243 = pneg %p237
      %p244 = scmp.eq.s32.totalorder %s28, 1
      %p245 = por %p243, %p244
      %p246 = scmp.ne.s32.totalorder %s238, %s241
      %p247 = scmp.eq.s32.totalorder %s28, 0
      %p248 = por %p246, %p247
      %p249 = scmp.ne.s32.totalorder %s238, %s241
      %p250 = scmp.eq.s32.totalorder %s33, 1
      %p251 = por %p249, %p250
      %p252 = scmp.ne.s32.totalorder %s241, %s242
      %p253 = scmp.eq.s32.totalorder %s33, 0
      %p254 = por %p252, %p253
      %p255 = scmp.ne.s32.totalorder %s241, %s242
      %p256 = scmp.eq.s32.totalorder %s34, 1
      %p257 = por %p255, %p256
      %p259 = scmp.ne.s32.totalorder %s242, %s258
      %p260 = scmp.eq.s32.totalorder %s34, 0
      %p261 = por %p259, %p260
      %s262 = sadd.s32 %s36, %s35
      %s263 = sadd.s32 %s43, %s47
      %s264 = ssub.s32 %s262, %s263
      %p265 = scmp.eq.s32.totalorder %s264, 0
      %s267 = sadd.s32 %s266, 1
      %s268 = scalar_select %p265, %s266, %s267
      %p271 = pneg %p265
      %p272 = scmp.eq.s32.totalorder %s28, 1
      %p273 = por %p271, %p272
      %p274 = scmp.ne.s32.totalorder %s266, %s269
      %p275 = scmp.eq.s32.totalorder %s28, 0
      %p276 = por %p274, %p275
      %p277 = scmp.ne.s32.totalorder %s266, %s269
      %p278 = scmp.eq.s32.totalorder %s33, 1
      %p279 = por %p277, %p278
      %p280 = scmp.ne.s32.totalorder %s269, %s270
      %p281 = scmp.eq.s32.totalorder %s33, 0
      %p282 = por %p280, %p281
      %p283 = scmp.ne.s32.totalorder %s269, %s270
      %p284 = scmp.eq.s32.totalorder %s34, 1
      %p285 = por %p283, %p284
      %p287 = scmp.ne.s32.totalorder %s270, %s286
      %p288 = scmp.eq.s32.totalorder %s34, 0
      %p289 = por %p287, %p288
      %s290 = sadd.s32 %s36, %s35
      %s291 = sadd.s32 %s43, %s47
      %s292 = ssub.s32 %s290, %s291
      %p293 = scmp.eq.s32.totalorder %s292, 0
      %s295 = sadd.s32 %s294, 1
      %s296 = scalar_select %p293, %s294, %s295
      %p299 = pneg %p293
      %p300 = scmp.eq.s32.totalorder %s28, 1
      %p301 = por %p299, %p300
      %p302 = scmp.ne.s32.totalorder %s294, %s297
      %p303 = scmp.eq.s32.totalorder %s28, 0
      %p304 = por %p302, %p303
      %p305 = scmp.ne.s32.totalorder %s294, %s297
      %p306 = scmp.eq.s32.totalorder %s33, 1
      %p307 = por %p305, %p306
      %p308 = scmp.ne.s32.totalorder %s297, %s298
      %p309 = scmp.eq.s32.totalorder %s33, 0
      %p310 = por %p308, %p309
      %p311 = scmp.ne.s32.totalorder %s297, %s298
      %p312 = scmp.eq.s32.totalorder %s34, 1
      %p313 = por %p311, %p312
      %p315 = scmp.ne.s32.totalorder %s298, %s314
      %p316 = scmp.eq.s32.totalorder %s34, 0
      %p317 = por %p315, %p316
      %s318 = sadd.s32 %s36, %s35
      %s319 = sadd.s32 %s43, %s47
      %s320 = ssub.s32 %s318, %s319
      %p321 = scmp.eq.s32.totalorder %s320, 0
      %s323 = sadd.s32 %s322, 1
      %s324 = scalar_select %p321, %s322, %s323
      %p327 = pneg %p321
      %p328 = scmp.eq.s32.totalorder %s28, 1
      %p329 = por %p327, %p328
      %p330 = scmp.ne.s32.totalorder %s322, %s325
      %p331 = scmp.eq.s32.totalorder %s28, 0
      %p332 = por %p330, %p331
      %p333 = scmp.ne.s32.totalorder %s322, %s325
      %p334 = scmp.eq.s32.totalorder %s33, 1
      %p335 = por %p333, %p334
      %p336 = scmp.ne.s32.totalorder %s325, %s326
      %p337 = scmp.eq.s32.totalorder %s33, 0
      %p338 = por %p336, %p337
      %p339 = scmp.ne.s32.totalorder %s325, %s326
      %p340 = scmp.eq.s32.totalorder %s34, 1
      %p341 = por %p339, %p340
      %p343 = scmp.ne.s32.totalorder %s326, %s342
      %p344 = scmp.eq.s32.totalorder %s34, 0
      %p345 = por %p343, %p344
      %p346 = scmp.le.s32.totalorder 1, %s28
      %p347 = scmp.lt.s32.totalorder %s28, 3
      %p348 = pnand %p346, %p347
      %p349 = pneg %p348
      // Predicated region
      $region9: #{tpu_custom_call.1} parent=5 // pred_check
        _
      $region10: #{tpu_custom_call.1} parent=5 // pred_check_branch
        %351 = sbr.rel (%p348) target = $region12
      $region11: #{tpu_custom_call.1} parent=5 // pred_region
        %s352 = ssub.s32 %s28, 1
        // Predicated region
        $region13: #{tpu_custom_call.1} parent=11 // pred_check
          %p353 = pneg %p66
        $region14: #{tpu_custom_call.1} parent=11 // pred_check_branch
          %355 = sbr.rel (%p353) target = $region16
        $region15: #{tpu_custom_call.1} parent=11 // pred_region
          %s356 = smul.u32 4, %s37
          %s358 = ssub.s32 2048, 2048
          %359 = vsyncadd [#allocation3], %s358
          %s360 = smul.addr %s356, 4
          %s361 = smul.addr %s360, 128
          %s362 = scalar_lea.hbm %s0, %s361
          %s363 = sshll.u32 [#allocation2], 4
          %s364 = int_to_ptr.vmem [resolvable:$true] %s363
          %369 = dma.hbm_to_vmem [thread:$0]  %s362, 2048, %s364, [#allocation3], 512, 512, 32
        $region16: #{tpu_custom_call.1} parent=11 // pred_fallthru
          _
        // Predicated region
        $region17: #{tpu_custom_call.1} parent=11 // pred_check
          %p370 = pneg %p92
        $region18: #{tpu_custom_call.1} parent=11 // pred_check_branch
          %372 = sbr.rel (%p370) target = $region20
        $region19: #{tpu_custom_call.1} parent=11 // pred_region
          %s373 = smul.u32 4, %s37
          %s375 = ssub.s32 2048, 2048
          %376 = vsyncadd [#allocation5], %s375
          %s377 = smul.addr %s373, 4
          %s378 = smul.addr %s377, 128
          %s379 = scalar_lea.hbm %s1, %s378
          %s380 = sshll.u32 [#allocation4], 4
          %s381 = int_to_ptr.vmem [resolvable:$true] %s380
          %386 = dma.hbm_to_vmem [thread:$0]  %s379, 2048, %s381, [#allocation5], 512, 512, 32
        $region20: #{tpu_custom_call.1} parent=11 // pred_fallthru
          _
        // Predicated region
        $region21: #{tpu_custom_call.1} parent=11 // pred_check
          %p387 = pneg %p118
        $region22: #{tpu_custom_call.1} parent=11 // pred_check_branch
          %389 = sbr.rel (%p387) target = $region24
        $region23: #{tpu_custom_call.1} parent=11 // pred_region
          %s390 = smul.u32 4, %s37
          %s392 = ssub.s32 2048, 2048
          %393 = vsyncadd [#allocation5], %s392
          %s394 = smul.addr %s390, 4
          %s395 = smul.addr %s394, 128
          %s396 = scalar_lea.hbm %s2, %s395
          %s397 = sshll.u32 [#allocation6], 4
          %s398 = int_to_ptr.vmem [resolvable:$true] %s397
          %403 = dma.hbm_to_vmem [thread:$0]  %s396, 2048, %s398, [#allocation5], 512, 512, 32
        $region24: #{tpu_custom_call.1} parent=11 // pred_fallthru
          _
        // Predicated region
        $region25: #{tpu_custom_call.1} parent=11 // pred_check
          %p404 = pneg %p144
        $region26: #{tpu_custom_call.1} parent=11 // pred_check_branch
          %406 = sbr.rel (%p404) target = $region28
        $region27: #{tpu_custom_call.1} parent=11 // pred_region
          %s407 = smul.u32 4, %s37
          %s409 = ssub.s32 2048, 2048
          %410 = vsyncadd [#allocation8], %s409
          %s411 = smul.addr %s407, 4
          %s412 = smul.addr %s411, 128
          %s413 = scalar_lea.hbm %s3, %s412
          %s414 = sshll.u32 [#allocation7], 4
          %s415 = int_to_ptr.vmem [resolvable:$true] %s414
          %420 = dma.hbm_to_vmem [thread:$0]  %s413, 2048, %s415, [#allocation8], 512, 512, 32
        $region28: #{tpu_custom_call.1} parent=11 // pred_fallthru
          _
        // Predicated region
        $region29: #{tpu_custom_call.1} parent=11 // pred_check
          %p421 = pneg %p170
        $region30: #{tpu_custom_call.1} parent=11 // pred_check_branch
          %423 = sbr.rel (%p421) target = $region32
        $region31: #{tpu_custom_call.1} parent=11 // pred_region
          %s424 = smul.u32 4, %s37
          %s426 = ssub.s32 2048, 2048
          %427 = vsyncadd [#allocation8], %s426
          %s428 = smul.addr %s424, 4
          %s429 = smul.addr %s428, 128
          %s430 = scalar_lea.hbm %s4, %s429
          %s431 = sshll.u32 [#allocation9], 4
          %s432 = int_to_ptr.vmem [resolvable:$true] %s431
          %437 = dma.hbm_to_vmem [thread:$0]  %s430, 2048, %s432, [#allocation8], 512, 512, 32
        $region32: #{tpu_custom_call.1} parent=11 // pred_fallthru
          _
      $region12: #{tpu_custom_call.1} parent=5 // pred_fallthru
        _
      %p438 = scmp.lt.s32.totalorder %s28, 2
      // Predicated region
      $region33: #{tpu_custom_call.1} parent=5 // pred_check
        %p439 = pneg %p438
      $region34: #{tpu_custom_call.1} parent=5 // pred_check_branch
        %441 = sbr.rel (%p439) target = $region36
      $region35: #{tpu_custom_call.1} parent=5 // pred_region
        // Predicated region
        $region37: #{tpu_custom_call.1} parent=35 // pred_check
          %p442 = pneg %p192
        $region38: #{tpu_custom_call.1} parent=35 // pred_check_branch
          %444 = sbr.rel (%p442) target = $region40
        $region39: #{tpu_custom_call.1} parent=35 // pred_region
          %s445 = sand.u32 %s28, 1
          %s446 = scalar_lea.sflag [#allocation11], %s445
          %s447 = sand.u32 %s182, 1
          %s448 = smul.addr %s447, 128
          %s449 = scalar_lea.vmem [#allocation10], %s448
          %s450 = sadd.s32 %s36, %s35
          %s451 = smul.u32 4, %s450
          %s453 = ssub.s32 2048, 2048
          %454 = vsyncadd %s446, %s453
          %s455 = smul.addr %s451, 4
          %s456 = smul.addr %s455, 128
          %s457 = scalar_lea.hbm %s5, %s456
          %s458 = sshll.u32 %s449, 4
          %s459 = int_to_ptr.vmem [resolvable:$true] %s458
          %464 = dma.hbm_to_vmem [thread:$0]  %s457, 2048, %s459, %s446, 512, 512, 32
        $region40: #{tpu_custom_call.1} parent=35 // pred_fallthru
          _
        // Predicated region
        $region41: #{tpu_custom_call.1} parent=35 // pred_check
          %p465 = pneg %p220
        $region42: #{tpu_custom_call.1} parent=35 // pred_check_branch
          %467 = sbr.rel (%p465) target = $region44
        $region43: #{tpu_custom_call.1} parent=35 // pred_region
          %s468 = sand.u32 %s28, 1
          %s469 = scalar_lea.sflag [#allocation11], %s468
          %s470 = sand.u32 %s210, 1
          %s471 = smul.addr %s470, 128
          %s472 = scalar_lea.vmem [#allocation12], %s471
          %s473 = sadd.s32 %s36, %s35
          %s474 = smul.u32 4, %s473
          %s476 = ssub.s32 2048, 2048
          %477 = vsyncadd %s469, %s476
          %s478 = smul.addr %s474, 4
          %s479 = smul.addr %s478, 128
          %s480 = scalar_lea.hbm %s6, %s479
          %s481 = sshll.u32 %s472, 4
          %s482 = int_to_ptr.vmem [resolvable:$true] %s481
          %487 = dma.hbm_to_vmem [thread:$0]  %s480, 2048, %s482, %s469, 512, 512, 32
        $region44: #{tpu_custom_call.1} parent=35 // pred_fallthru
          _
        // Predicated region
        $region45: #{tpu_custom_call.1} parent=35 // pred_check
          %p488 = pneg %p248
        $region46: #{tpu_custom_call.1} parent=35 // pred_check_branch
          %490 = sbr.rel (%p488) target = $region48
        $region47: #{tpu_custom_call.1} parent=35 // pred_region
          %s491 = sand.u32 %s28, 1
          %s492 = scalar_lea.sflag [#allocation14], %s491
          %s493 = sand.u32 %s238, 1
          %s494 = smul.addr %s493, 128
          %s495 = scalar_lea.vmem [#allocation13], %s494
          %s496 = sadd.s32 %s36, %s35
          %s497 = smul.u32 4, %s496
          %s499 = ssub.s32 2048, 2048
          %500 = vsyncadd %s492, %s499
          %s501 = smul.addr %s497, 4
          %s502 = smul.addr %s501, 128
          %s503 = scalar_lea.hbm %s7, %s502
          %s504 = sshll.u32 %s495, 4
          %s505 = int_to_ptr.vmem [resolvable:$true] %s504
          %510 = dma.hbm_to_vmem [thread:$0]  %s503, 2048, %s505, %s492, 512, 512, 32
        $region48: #{tpu_custom_call.1} parent=35 // pred_fallthru
          _
        // Predicated region
        $region49: #{tpu_custom_call.1} parent=35 // pred_check
          %p511 = pneg %p276
        $region50: #{tpu_custom_call.1} parent=35 // pred_check_branch
          %513 = sbr.rel (%p511) target = $region52
        $region51: #{tpu_custom_call.1} parent=35 // pred_region
          %s514 = sand.u32 %s28, 1
          %s515 = scalar_lea.sflag [#allocation14], %s514
          %s516 = sand.u32 %s266, 1
          %s517 = smul.addr %s516, 128
          %s518 = scalar_lea.vmem [#allocation15], %s517
          %s519 = sadd.s32 %s36, %s35
          %s520 = smul.u32 4, %s519
          %s522 = ssub.s32 2048, 2048
          %523 = vsyncadd %s515, %s522
          %s524 = smul.addr %s520, 4
          %s525 = smul.addr %s524, 128
          %s526 = scalar_lea.hbm %s8, %s525
          %s527 = sshll.u32 %s518, 4
          %s528 = int_to_ptr.vmem [resolvable:$true] %s527
          %533 = dma.hbm_to_vmem [thread:$0]  %s526, 2048, %s528, %s515, 512, 512, 32
        $region52: #{tpu_custom_call.1} parent=35 // pred_fallthru
          _
        // Predicated region
        $region53: #{tpu_custom_call.1} parent=35 // pred_check
          %p534 = pneg %p304
        $region54: #{tpu_custom_call.1} parent=35 // pred_check_branch
          %536 = sbr.rel (%p534) target = $region56
        $region55: #{tpu_custom_call.1} parent=35 // pred_region
          %s537 = sand.u32 %s294, 1
          %s538 = scalar_lea.sflag [#allocation17], %s537
          %s539 = sand.u32 %s294, 1
          %s540 = smul.addr %s539, 128
          %s541 = scalar_lea.vmem [#allocation16], %s540
          %s542 = sadd.s32 %s36, %s35
          %s543 = smul.u32 4, %s542
          %s545 = ssub.s32 2048, 2048
          %546 = vsyncadd %s538, %s545
          %s547 = smul.addr %s543, 4
          %s548 = smul.addr %s547, 128
          %s549 = scalar_lea.hbm %s9, %s548
          %s550 = sshll.u32 %s541, 4
          %s551 = int_to_ptr.vmem [resolvable:$true] %s550
          %556 = dma.hbm_to_vmem [thread:$0]  %s549, 2048, %s551, %s538, 512, 512, 32
        $region56: #{tpu_custom_call.1} parent=35 // pred_fallthru
          _
      $region36: #{tpu_custom_call.1} parent=5 // pred_fallthru
        _
      %p557 = scmp.le.s32.totalorder 1, %s28
      %p558 = scmp.lt.s32.totalorder %s28, 3
      %p559 = pnand %p557, %p558
      %p560 = pneg %p559
      // Predicated region
      $region57: #{tpu_custom_call.1} parent=5 // pred_check
        _
      $region58: #{tpu_custom_call.1} parent=5 // pred_check_branch
        %562 = sbr.rel (%p559) target = $region60
      $region59: #{tpu_custom_call.1} parent=5 // pred_region
        %s563 = ssub.s32 %s28, 1
        // Predicated region
        $region61: #{tpu_custom_call.1} parent=59 // pred_check
          %p564 = pneg %p66
        $region62: #{tpu_custom_call.1} parent=59 // pred_check_branch
          %566 = sbr.rel (%p564) target = $region64
        $region63: #{tpu_custom_call.1} parent=59 // pred_region
          %567 = dma.done [#allocation3], 2048
        $region64: #{tpu_custom_call.1} parent=59 // pred_fallthru
          _
        // Predicated region
        $region65: #{tpu_custom_call.1} parent=59 // pred_check
          %p568 = pneg %p92
        $region66: #{tpu_custom_call.1} parent=59 // pred_check_branch
          %570 = sbr.rel (%p568) target = $region68
        $region67: #{tpu_custom_call.1} parent=59 // pred_region
          %571 = dma.done [#allocation5], 2048
        $region68: #{tpu_custom_call.1} parent=59 // pred_fallthru
          _
        // Predicated region
        $region69: #{tpu_custom_call.1} parent=59 // pred_check
          %p572 = pneg %p118
        $region70: #{tpu_custom_call.1} parent=59 // pred_check_branch
          %574 = sbr.rel (%p572) target = $region72
        $region71: #{tpu_custom_call.1} parent=59 // pred_region
          %575 = dma.done [#allocation5], 2048
        $region72: #{tpu_custom_call.1} parent=59 // pred_fallthru
          _
        // Predicated region
        $region73: #{tpu_custom_call.1} parent=59 // pred_check
          %p576 = pneg %p144
        $region74: #{tpu_custom_call.1} parent=59 // pred_check_branch
          %578 = sbr.rel (%p576) target = $region76
        $region75: #{tpu_custom_call.1} parent=59 // pred_region
          %579 = dma.done [#allocation8], 2048
        $region76: #{tpu_custom_call.1} parent=59 // pred_fallthru
          _
        // Predicated region
        $region77: #{tpu_custom_call.1} parent=59 // pred_check
          %p580 = pneg %p170
        $region78: #{tpu_custom_call.1} parent=59 // pred_check_branch
          %582 = sbr.rel (%p580) target = $region80
        $region79: #{tpu_custom_call.1} parent=59 // pred_region
          %583 = dma.done [#allocation8], 2048
        $region80: #{tpu_custom_call.1} parent=59 // pred_fallthru
          _
        %s584 = sand.u32 %s33, 1
        %s585 = scalar_lea.sflag [#allocation11], %s584
        %s586 = sand.u32 %s185, 1
        %s587 = smul.addr %s586, 128
        %s588 = scalar_lea.vmem [#allocation10], %s587
        // Predicated region
        $region81: #{tpu_custom_call.1} parent=59 // pred_check
          %p589 = pneg %p198
        $region82: #{tpu_custom_call.1} parent=59 // pred_check_branch
          %591 = sbr.rel (%p589) target = $region84
        $region83: #{tpu_custom_call.1} parent=59 // pred_region
          %592 = dma.done %s585, 2048
        $region84: #{tpu_custom_call.1} parent=59 // pred_fallthru
          _
        %s593 = sand.u32 %s33, 1
        %s594 = scalar_lea.sflag [#allocation11], %s593
        %s595 = sand.u32 %s213, 1
        %s596 = smul.addr %s595, 128
        %s597 = scalar_lea.vmem [#allocation12], %s596
        // Predicated region
        $region85: #{tpu_custom_call.1} parent=59 // pred_check
          %p598 = pneg %p226
        $region86: #{tpu_custom_call.1} parent=59 // pred_check_branch
          %600 = sbr.rel (%p598) target = $region88
        $region87: #{tpu_custom_call.1} parent=59 // pred_region
          %601 = dma.done %s594, 2048
        $region88: #{tpu_custom_call.1} parent=59 // pred_fallthru
          _
        %s602 = sand.u32 %s33, 1
        %s603 = scalar_lea.sflag [#allocation14], %s602
        %s604 = sand.u32 %s241, 1
        %s605 = smul.addr %s604, 128
        %s606 = scalar_lea.vmem [#allocation13], %s605
        // Predicated region
        $region89: #{tpu_custom_call.1} parent=59 // pred_check
          %p607 = pneg %p254
        $region90: #{tpu_custom_call.1} parent=59 // pred_check_branch
          %609 = sbr.rel (%p607) target = $region92
        $region91: #{tpu_custom_call.1} parent=59 // pred_region
          %610 = dma.done %s603, 2048
        $region92: #{tpu_custom_call.1} parent=59 // pred_fallthru
          _
        %s611 = sand.u32 %s33, 1
        %s612 = scalar_lea.sflag [#allocation14], %s611
        %s613 = sand.u32 %s269, 1
        %s614 = smul.addr %s613, 128
        %s615 = scalar_lea.vmem [#allocation15], %s614
        // Predicated region
        $region93: #{tpu_custom_call.1} parent=59 // pred_check
          %p616 = pneg %p282
        $region94: #{tpu_custom_call.1} parent=59 // pred_check_branch
          %618 = sbr.rel (%p616) target = $region96
        $region95: #{tpu_custom_call.1} parent=59 // pred_region
          %619 = dma.done %s612, 2048
        $region96: #{tpu_custom_call.1} parent=59 // pred_fallthru
          _
        %s620 = sand.u32 %s297, 1
        %s621 = scalar_lea.sflag [#allocation17], %s620
        %s622 = sand.u32 %s297, 1
        %s623 = smul.addr %s622, 128
        %s624 = scalar_lea.vmem [#allocation16], %s623
        // Predicated region
        $region97: #{tpu_custom_call.1} parent=59 // pred_check
          %p625 = pneg %p310
        $region98: #{tpu_custom_call.1} parent=59 // pred_check_branch
          %627 = sbr.rel (%p625) target = $region100
        $region99: #{tpu_custom_call.1} parent=59 // pred_region
          %628 = dma.done %s621, 2048
        $region100: #{tpu_custom_call.1} parent=59 // pred_fallthru
          _
        %p629 = pneg %p66
        %p630 = pneg %p63
        %p631 = pneg %p92
        %p632 = pneg %p89
        %p633 = pneg %p118
        %p634 = pneg %p115
        %p635 = pneg %p144
        %p636 = pneg %p141
        %p637 = pneg %p170
        %p638 = pneg %p167
        %s639 = sand.u32 %s33, 1
        %s640 = scalar_lea.sflag [#allocation11], %s639
        %s641 = sand.u32 %s185, 1
        %s642 = smul.addr %s641, 128
        %s643 = scalar_lea.vmem [#allocation10], %s642
        %p644 = pneg %p198
        %p645 = pneg %p195
        %s646 = sand.u32 %s33, 1
        %s647 = scalar_lea.sflag [#allocation11], %s646
        %s648 = sand.u32 %s213, 1
        %s649 = smul.addr %s648, 128
        %s650 = scalar_lea.vmem [#allocation12], %s649
        %p651 = pneg %p226
        %p652 = pneg %p223
        %s653 = sand.u32 %s33, 1
        %s654 = scalar_lea.sflag [#allocation14], %s653
        %s655 = sand.u32 %s241, 1
        %s656 = smul.addr %s655, 128
        %s657 = scalar_lea.vmem [#allocation13], %s656
        %p658 = pneg %p254
        %p659 = pneg %p251
        %s660 = sand.u32 %s33, 1
        %s661 = scalar_lea.sflag [#allocation14], %s660
        %s662 = sand.u32 %s269, 1
        %s663 = smul.addr %s662, 128
        %s664 = scalar_lea.vmem [#allocation15], %s663
        %p665 = pneg %p282
        %p666 = pneg %p279
        %s667 = sand.u32 %s297, 1
        %s668 = scalar_lea.sflag [#allocation17], %s667
        %s669 = sand.u32 %s297, 1
        %s670 = smul.addr %s669, 128
        %s671 = scalar_lea.vmem [#allocation16], %s670
        %p672 = pneg %p310
        %p673 = pneg %p307
        %p674 = pneg %p338
        %p675 = pneg %p335
        %s676 = sadd.s32 %s38, %s37
        %s677 = smul.u32 4, %s676
        %p678 = scmp.lt.s32.totalorder %s677, 7
        %s679 = scalar_select %p678, %s677, 7
        %s680 = smul.addr %s679, 8
        %s681 = scalar_lea.vmem %s10, %s680
        %s682 = smul.u32 4, %s37
        %s683 = smul.u32 4, %s37
        %s684 = smul.u32 4, %s37
        %s685 = smul.u32 4, %s37
        %s686 = smul.u32 4, %s37
        %s687 = sadd.s32 %s38, %s37
        %s688 = smul.u32 4, %s687
        %s689 = sadd.s32 %s38, %s37
        %s690 = smul.u32 4, %s689
        %s691 = sadd.s32 %s38, %s37
        %s692 = smul.u32 4, %s691
        %s693 = sadd.s32 %s38, %s37
        %s694 = smul.u32 4, %s693
        %s695 = sadd.s32 %s38, %s37
        %s696 = smul.u32 4, %s695
        %s697 = sadd.s32 %s38, %s37
        %s698 = smul.u32 4, %s697
        %p699 = scmp.lt.s32.totalorder %s698, 7
        %s700 = scalar_select %p699, %s698, 7
        %s701 = smul.addr %s700, 8
        %s702 = scalar_lea.vmem %s10, %s701
        %s703 = sadd.s32 %s38, %s37
        %s704 = smul.u32 4, %s703
        %v705 = vld [vmem:[#allocation2] sm:$0xff]
        %v706 = vld [vmem:[#allocation2 + $0x8] sm:$0xff]
        %v707 = vld [vmem:[#allocation2 + $0x10] sm:$0xff]
        %v708 = vld [vmem:[#allocation2 + $0x18] sm:$0xff]
        %v709 = vld [vmem:[#allocation2 + $0x20] sm:$0xff]
        %v710 = vld [vmem:[#allocation2 + $0x28] sm:$0xff]
        %v711 = vld [vmem:[#allocation2 + $0x30] sm:$0xff]
        %v712 = vld [vmem:[#allocation2 + $0x38] sm:$0xff]
        %v713 = vld [vmem:[#allocation2 + $0x40] sm:$0xff]
        %v714 = vld [vmem:[#allocation2 + $0x48] sm:$0xff]
        %v715 = vld [vmem:[#allocation2 + $0x50] sm:$0xff]
        %v716 = vld [vmem:[#allocation2 + $0x58] sm:$0xff]
        %v717 = vld [vmem:[#allocation2 + $0x60] sm:$0xff]
        %v718 = vld [vmem:[#allocation2 + $0x68] sm:$0xff]
        %v719 = vld [vmem:[#allocation2 + $0x70] sm:$0xff]
        %v720 = vld [vmem:[#allocation2 + $0x78] sm:$0xff]
        %v721 = vld [vmem:[#allocation4] sm:$0xff]
        %v722 = vld [vmem:[#allocation4 + $0x8] sm:$0xff]
        %v723 = vld [vmem:[#allocation4 + $0x10] sm:$0xff]
        %v724 = vld [vmem:[#allocation4 + $0x18] sm:$0xff]
        %v725 = vld [vmem:[#allocation4 + $0x20] sm:$0xff]
        %v726 = vld [vmem:[#allocation4 + $0x28] sm:$0xff]
        %v727 = vld [vmem:[#allocation4 + $0x30] sm:$0xff]
        %v728 = vld [vmem:[#allocation4 + $0x38] sm:$0xff]
        %v729 = vld [vmem:[#allocation4 + $0x40] sm:$0xff]
        %v730 = vld [vmem:[#allocation4 + $0x48] sm:$0xff]
        %v731 = vld [vmem:[#allocation4 + $0x50] sm:$0xff]
        %v732 = vld [vmem:[#allocation4 + $0x58] sm:$0xff]
        %v733 = vld [vmem:[#allocation4 + $0x60] sm:$0xff]
        %v734 = vld [vmem:[#allocation4 + $0x68] sm:$0xff]
        %v735 = vld [vmem:[#allocation4 + $0x70] sm:$0xff]
        %v736 = vld [vmem:[#allocation4 + $0x78] sm:$0xff]
        %v737 = vld [vmem:[#allocation6] sm:$0xff]
        %v738 = vld [vmem:[#allocation6 + $0x8] sm:$0xff]
        %v739 = vld [vmem:[#allocation6 + $0x10] sm:$0xff]
        %v740 = vld [vmem:[#allocation6 + $0x18] sm:$0xff]
        %v741 = vld [vmem:[#allocation6 + $0x20] sm:$0xff]
        %v742 = vld [vmem:[#allocation6 + $0x28] sm:$0xff]
        %v743 = vld [vmem:[#allocation6 + $0x30] sm:$0xff]
        %v744 = vld [vmem:[#allocation6 + $0x38] sm:$0xff]
        %v745 = vld [vmem:[#allocation6 + $0x40] sm:$0xff]
        %v746 = vld [vmem:[#allocation6 + $0x48] sm:$0xff]
        %v747 = vld [vmem:[#allocation6 + $0x50] sm:$0xff]
        %v748 = vld [vmem:[#allocation6 + $0x58] sm:$0xff]
        %v749 = vld [vmem:[#allocation6 + $0x60] sm:$0xff]
        %v750 = vld [vmem:[#allocation6 + $0x68] sm:$0xff]
        %v751 = vld [vmem:[#allocation6 + $0x70] sm:$0xff]
        %v752 = vld [vmem:[#allocation6 + $0x78] sm:$0xff]
        %v753 = vld [vmem:[#allocation7] sm:$0xff]
        %v754 = vld [vmem:[#allocation7 + $0x8] sm:$0xff]
        %v755 = vld [vmem:[#allocation7 + $0x10] sm:$0xff]
        %v756 = vld [vmem:[#allocation7 + $0x18] sm:$0xff]
        %v757 = vld [vmem:[#allocation7 + $0x20] sm:$0xff]
        %v758 = vld [vmem:[#allocation7 + $0x28] sm:$0xff]
        %v759 = vld [vmem:[#allocation7 + $0x30] sm:$0xff]
        %v760 = vld [vmem:[#allocation7 + $0x38] sm:$0xff]
        %v761 = vld [vmem:[#allocation7 + $0x40] sm:$0xff]
        %v762 = vld [vmem:[#allocation7 + $0x48] sm:$0xff]
        %v763 = vld [vmem:[#allocation7 + $0x50] sm:$0xff]
        %v764 = vld [vmem:[#allocation7 + $0x58] sm:$0xff]
        %v765 = vld [vmem:[#allocation7 + $0x60] sm:$0xff]
        %v766 = vld [vmem:[#allocation7 + $0x68] sm:$0xff]
        %v767 = vld [vmem:[#allocation7 + $0x70] sm:$0xff]
        %v768 = vld [vmem:[#allocation7 + $0x78] sm:$0xff]
        %v769 = vld [vmem:[#allocation9] sm:$0xff]
        %v770 = vld [vmem:[#allocation9 + $0x8] sm:$0xff]
        %v771 = vld [vmem:[#allocation9 + $0x10] sm:$0xff]
        %v772 = vld [vmem:[#allocation9 + $0x18] sm:$0xff]
        %v773 = vld [vmem:[#allocation9 + $0x20] sm:$0xff]
        %v774 = vld [vmem:[#allocation9 + $0x28] sm:$0xff]
        %v775 = vld [vmem:[#allocation9 + $0x30] sm:$0xff]
        %v776 = vld [vmem:[#allocation9 + $0x38] sm:$0xff]
        %v777 = vld [vmem:[#allocation9 + $0x40] sm:$0xff]
        %v778 = vld [vmem:[#allocation9 + $0x48] sm:$0xff]
        %v779 = vld [vmem:[#allocation9 + $0x50] sm:$0xff]
        %v780 = vld [vmem:[#allocation9 + $0x58] sm:$0xff]
        %v781 = vld [vmem:[#allocation9 + $0x60] sm:$0xff]
        %v782 = vld [vmem:[#allocation9 + $0x68] sm:$0xff]
        %v783 = vld [vmem:[#allocation9 + $0x70] sm:$0xff]
        %v784 = vld [vmem:[#allocation9 + $0x78] sm:$0xff]
        %v785 = vadd.f32 %v705, %v769
        %v786 = vadd.f32 %v706, %v770
        %v787 = vadd.f32 %v707, %v771
        %v788 = vadd.f32 %v708, %v772
        %v789 = vadd.f32 %v709, %v773
        %v790 = vadd.f32 %v710, %v774
        %v791 = vadd.f32 %v711, %v775
        %v792 = vadd.f32 %v712, %v776
        %v793 = vadd.f32 %v713, %v777
        %v794 = vadd.f32 %v714, %v778
        %v795 = vadd.f32 %v715, %v779
        %v796 = vadd.f32 %v716, %v780
        %v797 = vadd.f32 %v717, %v781
        %v798 = vadd.f32 %v718, %v782
        %v799 = vadd.f32 %v719, %v783
        %v800 = vadd.f32 %v720, %v784
        %v801 = vadd.f32 %v737, %v769
        %v802 = vadd.f32 %v738, %v770
        %v803 = vadd.f32 %v739, %v771
        %v804 = vadd.f32 %v740, %v772
        %v805 = vadd.f32 %v741, %v773
        %v806 = vadd.f32 %v742, %v774
        %v807 = vadd.f32 %v743, %v775
        %v808 = vadd.f32 %v744, %v776
        %v809 = vadd.f32 %v745, %v777
        %v810 = vadd.f32 %v746, %v778
        %v811 = vadd.f32 %v747, %v779
        %v812 = vadd.f32 %v748, %v780
        %v813 = vadd.f32 %v749, %v781
        %v814 = vadd.f32 %v750, %v782
        %v815 = vadd.f32 %v751, %v783
        %v816 = vadd.f32 %v752, %v784
        %v817 = vsub.f32 %v785, %v721
        %v818 = vsub.f32 %v786, %v722
        %v819 = vsub.f32 %v787, %v723
        %v820 = vsub.f32 %v788, %v724
        %v821 = vsub.f32 %v789, %v725
        %v822 = vsub.f32 %v790, %v726
        %v823 = vsub.f32 %v791, %v727
        %v824 = vsub.f32 %v792, %v728
        %v825 = vsub.f32 %v793, %v729
        %v826 = vsub.f32 %v794, %v730
        %v827 = vsub.f32 %v795, %v731
        %v828 = vsub.f32 %v796, %v732
        %v829 = vsub.f32 %v797, %v733
        %v830 = vsub.f32 %v798, %v734
        %v831 = vsub.f32 %v799, %v735
        %v832 = vsub.f32 %v800, %v736
        %v833 = vsub.f32 %v785, %v753
        %v834 = vsub.f32 %v786, %v754
        %v835 = vsub.f32 %v787, %v755
        %v836 = vsub.f32 %v788, %v756
        %v837 = vsub.f32 %v789, %v757
        %v838 = vsub.f32 %v790, %v758
        %v839 = vsub.f32 %v791, %v759
        %v840 = vsub.f32 %v792, %v760
        %v841 = vsub.f32 %v793, %v761
        %v842 = vsub.f32 %v794, %v762
        %v843 = vsub.f32 %v795, %v763
        %v844 = vsub.f32 %v796, %v764
        %v845 = vsub.f32 %v797, %v765
        %v846 = vsub.f32 %v798, %v766
        %v847 = vsub.f32 %v799, %v767
        %v848 = vsub.f32 %v800, %v768
        %v849 = vsub.f32 %v801, %v721
        %v850 = vsub.f32 %v802, %v722
        %v851 = vsub.f32 %v803, %v723
        %v852 = vsub.f32 %v804, %v724
        %v853 = vsub.f32 %v805, %v725
        %v854 = vsub.f32 %v806, %v726
        %v855 = vsub.f32 %v807, %v727
        %v856 = vsub.f32 %v808, %v728
        %v857 = vsub.f32 %v809, %v729
        %v858 = vsub.f32 %v810, %v730
        %v859 = vsub.f32 %v811, %v731
        %v860 = vsub.f32 %v812, %v732
        %v861 = vsub.f32 %v813, %v733
        %v862 = vsub.f32 %v814, %v734
        %v863 = vsub.f32 %v815, %v735
        %v864 = vsub.f32 %v816, %v736
        %v865 = vsub.f32 %v801, %v753
        %v866 = vsub.f32 %v802, %v754
        %v867 = vsub.f32 %v803, %v755
        %v868 = vsub.f32 %v804, %v756
        %v869 = vsub.f32 %v805, %v757
        %v870 = vsub.f32 %v806, %v758
        %v871 = vsub.f32 %v807, %v759
        %v872 = vsub.f32 %v808, %v760
        %v873 = vsub.f32 %v809, %v761
        %v874 = vsub.f32 %v810, %v762
        %v875 = vsub.f32 %v811, %v763
        %v876 = vsub.f32 %v812, %v764
        %v877 = vsub.f32 %v813, %v765
        %v878 = vsub.f32 %v814, %v766
        %v879 = vsub.f32 %v815, %v767
        %v880 = vsub.f32 %v816, %v768
        %v881 = vsub.f32 %v737, %v753
        %v882 = vsub.f32 %v738, %v754
        %v883 = vsub.f32 %v739, %v755
        %v884 = vsub.f32 %v740, %v756
        %v885 = vsub.f32 %v741, %v757
        %v886 = vsub.f32 %v742, %v758
        %v887 = vsub.f32 %v743, %v759
        %v888 = vsub.f32 %v744, %v760
        %v889 = vsub.f32 %v745, %v761
        %v890 = vsub.f32 %v746, %v762
        %v891 = vsub.f32 %v747, %v763
        %v892 = vsub.f32 %v748, %v764
        %v893 = vsub.f32 %v749, %v765
        %v894 = vsub.f32 %v750, %v766
        %v895 = vsub.f32 %v751, %v767
        %v896 = vsub.f32 %v752, %v768
        %v897 = vadd.f32 %v817, %v881
        %v898 = vadd.f32 %v818, %v882
        %v899 = vadd.f32 %v819, %v883
        %v900 = vadd.f32 %v820, %v884
        %v901 = vadd.f32 %v821, %v885
        %v902 = vadd.f32 %v822, %v886
        %v903 = vadd.f32 %v823, %v887
        %v904 = vadd.f32 %v824, %v888
        %v905 = vadd.f32 %v825, %v889
        %v906 = vadd.f32 %v826, %v890
        %v907 = vadd.f32 %v827, %v891
        %v908 = vadd.f32 %v828, %v892
        %v909 = vadd.f32 %v829, %v893
        %v910 = vadd.f32 %v830, %v894
        %v911 = vadd.f32 %v831, %v895
        %v912 = vadd.f32 %v832, %v896
        %v913 = vand.u32 2147483647, %v817
        %v914 = vand.u32 2147483647, %v818
        %v915 = vand.u32 2147483647, %v819
        %v916 = vand.u32 2147483647, %v820
        %v917 = vand.u32 2147483647, %v821
        %v918 = vand.u32 2147483647, %v822
        %v919 = vand.u32 2147483647, %v823
        %v920 = vand.u32 2147483647, %v824
        %v921 = vand.u32 2147483647, %v825
        %v922 = vand.u32 2147483647, %v826
        %v923 = vand.u32 2147483647, %v827
        %v924 = vand.u32 2147483647, %v828
        %v925 = vand.u32 2147483647, %v829
        %v926 = vand.u32 2147483647, %v830
        %v927 = vand.u32 2147483647, %v831
        %v928 = vand.u32 2147483647, %v832
        %v929 = vand.u32 2147483647, %v833
        %v930 = vand.u32 2147483647, %v834
        %v931 = vand.u32 2147483647, %v835
        %v932 = vand.u32 2147483647, %v836
        %v933 = vand.u32 2147483647, %v837
        %v934 = vand.u32 2147483647, %v838
        %v935 = vand.u32 2147483647, %v839
        %v936 = vand.u32 2147483647, %v840
        %v937 = vand.u32 2147483647, %v841
        %v938 = vand.u32 2147483647, %v842
        %v939 = vand.u32 2147483647, %v843
        %v940 = vand.u32 2147483647, %v844
        %v941 = vand.u32 2147483647, %v845
        %v942 = vand.u32 2147483647, %v846
        %v943 = vand.u32 2147483647, %v847
        %v944 = vand.u32 2147483647, %v848
        %v945 = vadd.f32 %v913, %v929
        %v946 = vadd.f32 %v914, %v930
        %v947 = vadd.f32 %v915, %v931
        %v948 = vadd.f32 %v916, %v932
        %v949 = vadd.f32 %v917, %v933
        %v950 = vadd.f32 %v918, %v934
        %v951 = vadd.f32 %v919, %v935
        %v952 = vadd.f32 %v920, %v936
        %v953 = vadd.f32 %v921, %v937
        %v954 = vadd.f32 %v922, %v938
        %v955 = vadd.f32 %v923, %v939
        %v956 = vadd.f32 %v924, %v940
        %v957 = vadd.f32 %v925, %v941
        %v958 = vadd.f32 %v926, %v942
        %v959 = vadd.f32 %v927, %v943
        %v960 = vadd.f32 %v928, %v944
        %v961 = vand.u32 2147483647, %v849
        %v962 = vand.u32 2147483647, %v850
        %v963 = vand.u32 2147483647, %v851
        %v964 = vand.u32 2147483647, %v852
        %v965 = vand.u32 2147483647, %v853
        %v966 = vand.u32 2147483647, %v854
        %v967 = vand.u32 2147483647, %v855
        %v968 = vand.u32 2147483647, %v856
        %v969 = vand.u32 2147483647, %v857
        %v970 = vand.u32 2147483647, %v858
        %v971 = vand.u32 2147483647, %v859
        %v972 = vand.u32 2147483647, %v860
        %v973 = vand.u32 2147483647, %v861
        %v974 = vand.u32 2147483647, %v862
        %v975 = vand.u32 2147483647, %v863
        %v976 = vand.u32 2147483647, %v864
        %v977 = vadd.f32 %v945, %v961
        %v978 = vadd.f32 %v946, %v962
        %v979 = vadd.f32 %v947, %v963
        %v980 = vadd.f32 %v948, %v964
        %v981 = vadd.f32 %v949, %v965
        %v982 = vadd.f32 %v950, %v966
        %v983 = vadd.f32 %v951, %v967
        %v984 = vadd.f32 %v952, %v968
        %v985 = vadd.f32 %v953, %v969
        %v986 = vadd.f32 %v954, %v970
        %v987 = vadd.f32 %v955, %v971
        %v988 = vadd.f32 %v956, %v972
        %v989 = vadd.f32 %v957, %v973
        %v990 = vadd.f32 %v958, %v974
        %v991 = vadd.f32 %v959, %v975
        %v992 = vadd.f32 %v960, %v976
        %v993 = vand.u32 2147483647, %v865
        %v994 = vand.u32 2147483647, %v866
        %v995 = vand.u32 2147483647, %v867
        %v996 = vand.u32 2147483647, %v868
        %v997 = vand.u32 2147483647, %v869
        %v998 = vand.u32 2147483647, %v870
        %v999 = vand.u32 2147483647, %v871
        %v1000 = vand.u32 2147483647, %v872
        %v1001 = vand.u32 2147483647, %v873
        %v1002 = vand.u32 2147483647, %v874
        %v1003 = vand.u32 2147483647, %v875
        %v1004 = vand.u32 2147483647, %v876
        %v1005 = vand.u32 2147483647, %v877
        %v1006 = vand.u32 2147483647, %v878
        %v1007 = vand.u32 2147483647, %v879
        %v1008 = vand.u32 2147483647, %v880
        %v1009 = vadd.f32 %v977, %v993
        %v1010 = vadd.f32 %v978, %v994
        %v1011 = vadd.f32 %v979, %v995
        %v1012 = vadd.f32 %v980, %v996
        %v1013 = vadd.f32 %v981, %v997
        %v1014 = vadd.f32 %v982, %v998
        %v1015 = vadd.f32 %v983, %v999
        %v1016 = vadd.f32 %v984, %v1000
        %v1017 = vadd.f32 %v985, %v1001
        %v1018 = vadd.f32 %v986, %v1002
        %v1019 = vadd.f32 %v987, %v1003
        %v1020 = vadd.f32 %v988, %v1004
        %v1021 = vadd.f32 %v989, %v1005
        %v1022 = vadd.f32 %v990, %v1006
        %v1023 = vadd.f32 %v991, %v1007
        %v1024 = vadd.f32 %v992, %v1008
        %v1025 = vand.u32 2147483647, %v897
        %v1026 = vand.u32 2147483647, %v898
        %v1027 = vand.u32 2147483647, %v899
        %v1028 = vand.u32 2147483647, %v900
        %v1029 = vand.u32 2147483647, %v901
        %v1030 = vand.u32 2147483647, %v902
        %v1031 = vand.u32 2147483647, %v903
        %v1032 = vand.u32 2147483647, %v904
        %v1033 = vand.u32 2147483647, %v905
        %v1034 = vand.u32 2147483647, %v906
        %v1035 = vand.u32 2147483647, %v907
        %v1036 = vand.u32 2147483647, %v908
        %v1037 = vand.u32 2147483647, %v909
        %v1038 = vand.u32 2147483647, %v910
        %v1039 = vand.u32 2147483647, %v911
        %v1040 = vand.u32 2147483647, %v912
        %v1041 = vadd.f32 %v1009, %v1025
        %v1042 = vadd.f32 %v1010, %v1026
        %v1043 = vadd.f32 %v1011, %v1027
        %v1044 = vadd.f32 %v1012, %v1028
        %v1045 = vadd.f32 %v1013, %v1029
        %v1046 = vadd.f32 %v1014, %v1030
        %v1047 = vadd.f32 %v1015, %v1031
        %v1048 = vadd.f32 %v1016, %v1032
        %v1049 = vadd.f32 %v1017, %v1033
        %v1050 = vadd.f32 %v1018, %v1034
        %v1051 = vadd.f32 %v1019, %v1035
        %v1052 = vadd.f32 %v1020, %v1036
        %v1053 = vadd.f32 %v1021, %v1037
        %v1054 = vadd.f32 %v1022, %v1038
        %v1055 = vadd.f32 %v1023, %v1039
        %v1056 = vadd.f32 %v1024, %v1040
        %v1057 = vadd.f32 %v1041, %v1042
        %v1058 = vadd.f32 %v1057, %v1043
        %v1059 = vadd.f32 %v1058, %v1044
        %1060 = vadd.xlane.f32.xlu0 %v1059
        %v1061 = vpop.xlane.xlu0 %1060
        %v1062 = vadd.f32 %v1045, %v1046
        %v1063 = vadd.f32 %v1062, %v1047
        %v1064 = vadd.f32 %v1063, %v1048
        %1065 = vadd.xlane.f32.xlu0 %v1064
        %v1066 = vpop.xlane.xlu0 %1065
        %v1067 = vadd.f32 %v1049, %v1050
        %v1068 = vadd.f32 %v1067, %v1051
        %v1069 = vadd.f32 %v1068, %v1052
        %1070 = vadd.xlane.f32.xlu0 %v1069
        %v1071 = vpop.xlane.xlu0 %1070
        %v1072 = vadd.f32 %v1053, %v1054
        %v1073 = vadd.f32 %v1072, %v1055
        %v1074 = vadd.f32 %v1073, %v1056
        %1075 = vadd.xlane.f32.xlu0 %v1074
        %v1076 = vpop.xlane.xlu0 %1075
        %v1077 = vld [vmem:[%s588] sm:$0xff]
        %v1078 = vld [vmem:[%s588 + $0x8] sm:$0xff]
        %v1079 = vld [vmem:[%s588 + $0x10] sm:$0xff]
        %v1080 = vld [vmem:[%s588 + $0x18] sm:$0xff]
        %v1081 = vld [vmem:[%s588 + $0x20] sm:$0xff]
        %v1082 = vld [vmem:[%s588 + $0x28] sm:$0xff]
        %v1083 = vld [vmem:[%s588 + $0x30] sm:$0xff]
        %v1084 = vld [vmem:[%s588 + $0x38] sm:$0xff]
        %v1085 = vld [vmem:[%s588 + $0x40] sm:$0xff]
        %v1086 = vld [vmem:[%s588 + $0x48] sm:$0xff]
        %v1087 = vld [vmem:[%s588 + $0x50] sm:$0xff]
        %v1088 = vld [vmem:[%s588 + $0x58] sm:$0xff]
        %v1089 = vld [vmem:[%s588 + $0x60] sm:$0xff]
        %v1090 = vld [vmem:[%s588 + $0x68] sm:$0xff]
        %v1091 = vld [vmem:[%s588 + $0x70] sm:$0xff]
        %v1092 = vld [vmem:[%s588 + $0x78] sm:$0xff]
        %v1093 = vld [vmem:[%s597] sm:$0xff]
        %v1094 = vld [vmem:[%s597 + $0x8] sm:$0xff]
        %v1095 = vld [vmem:[%s597 + $0x10] sm:$0xff]
        %v1096 = vld [vmem:[%s597 + $0x18] sm:$0xff]
        %v1097 = vld [vmem:[%s597 + $0x20] sm:$0xff]
        %v1098 = vld [vmem:[%s597 + $0x28] sm:$0xff]
        %v1099 = vld [vmem:[%s597 + $0x30] sm:$0xff]
        %v1100 = vld [vmem:[%s597 + $0x38] sm:$0xff]
        %v1101 = vld [vmem:[%s597 + $0x40] sm:$0xff]
        %v1102 = vld [vmem:[%s597 + $0x48] sm:$0xff]
        %v1103 = vld [vmem:[%s597 + $0x50] sm:$0xff]
        %v1104 = vld [vmem:[%s597 + $0x58] sm:$0xff]
        %v1105 = vld [vmem:[%s597 + $0x60] sm:$0xff]
        %v1106 = vld [vmem:[%s597 + $0x68] sm:$0xff]
        %v1107 = vld [vmem:[%s597 + $0x70] sm:$0xff]
        %v1108 = vld [vmem:[%s597 + $0x78] sm:$0xff]
        %v1109 = vld [vmem:[%s606] sm:$0xff]
        %v1110 = vld [vmem:[%s606 + $0x8] sm:$0xff]
        %v1111 = vld [vmem:[%s606 + $0x10] sm:$0xff]
        %v1112 = vld [vmem:[%s606 + $0x18] sm:$0xff]
        %v1113 = vld [vmem:[%s606 + $0x20] sm:$0xff]
        %v1114 = vld [vmem:[%s606 + $0x28] sm:$0xff]
        %v1115 = vld [vmem:[%s606 + $0x30] sm:$0xff]
        %v1116 = vld [vmem:[%s606 + $0x38] sm:$0xff]
        %v1117 = vld [vmem:[%s606 + $0x40] sm:$0xff]
        %v1118 = vld [vmem:[%s606 + $0x48] sm:$0xff]
        %v1119 = vld [vmem:[%s606 + $0x50] sm:$0xff]
        %v1120 = vld [vmem:[%s606 + $0x58] sm:$0xff]
        %v1121 = vld [vmem:[%s606 + $0x60] sm:$0xff]
        %v1122 = vld [vmem:[%s606 + $0x68] sm:$0xff]
        %v1123 = vld [vmem:[%s606 + $0x70] sm:$0xff]
        %v1124 = vld [vmem:[%s606 + $0x78] sm:$0xff]
        %v1125 = vld [vmem:[%s615] sm:$0xff]
        %v1126 = vld [vmem:[%s615 + $0x8] sm:$0xff]
        %v1127 = vld [vmem:[%s615 + $0x10] sm:$0xff]
        %v1128 = vld [vmem:[%s615 + $0x18] sm:$0xff]
        %v1129 = vld [vmem:[%s615 + $0x20] sm:$0xff]
        %v1130 = vld [vmem:[%s615 + $0x28] sm:$0xff]
        %v1131 = vld [vmem:[%s615 + $0x30] sm:$0xff]
        %v1132 = vld [vmem:[%s615 + $0x38] sm:$0xff]
        %v1133 = vld [vmem:[%s615 + $0x40] sm:$0xff]
        %v1134 = vld [vmem:[%s615 + $0x48] sm:$0xff]
        %v1135 = vld [vmem:[%s615 + $0x50] sm:$0xff]
        %v1136 = vld [vmem:[%s615 + $0x58] sm:$0xff]
        %v1137 = vld [vmem:[%s615 + $0x60] sm:$0xff]
        %v1138 = vld [vmem:[%s615 + $0x68] sm:$0xff]
        %v1139 = vld [vmem:[%s615 + $0x70] sm:$0xff]
        %v1140 = vld [vmem:[%s615 + $0x78] sm:$0xff]
        %v1141 = vld [vmem:[%s624] sm:$0xff]
        %v1142 = vld [vmem:[%s624 + $0x8] sm:$0xff]
        %v1143 = vld [vmem:[%s624 + $0x10] sm:$0xff]
        %v1144 = vld [vmem:[%s624 + $0x18] sm:$0xff]
        %v1145 = vld [vmem:[%s624 + $0x20] sm:$0xff]
        %v1146 = vld [vmem:[%s624 + $0x28] sm:$0xff]
        %v1147 = vld [vmem:[%s624 + $0x30] sm:$0xff]
        %v1148 = vld [vmem:[%s624 + $0x38] sm:$0xff]
        %v1149 = vld [vmem:[%s624 + $0x40] sm:$0xff]
        %v1150 = vld [vmem:[%s624 + $0x48] sm:$0xff]
        %v1151 = vld [vmem:[%s624 + $0x50] sm:$0xff]
        %v1152 = vld [vmem:[%s624 + $0x58] sm:$0xff]
        %v1153 = vld [vmem:[%s624 + $0x60] sm:$0xff]
        %v1154 = vld [vmem:[%s624 + $0x68] sm:$0xff]
        %v1155 = vld [vmem:[%s624 + $0x70] sm:$0xff]
        %v1156 = vld [vmem:[%s624 + $0x78] sm:$0xff]
        %v1157 = vadd.f32 %v1077, %v1141
        %v1158 = vadd.f32 %v1078, %v1142
        %v1159 = vadd.f32 %v1079, %v1143
        %v1160 = vadd.f32 %v1080, %v1144
        %v1161 = vadd.f32 %v1081, %v1145
        %v1162 = vadd.f32 %v1082, %v1146
        %v1163 = vadd.f32 %v1083, %v1147
        %v1164 = vadd.f32 %v1084, %v1148
        %v1165 = vadd.f32 %v1085, %v1149
        %v1166 = vadd.f32 %v1086, %v1150
        %v1167 = vadd.f32 %v1087, %v1151
        %v1168 = vadd.f32 %v1088, %v1152
        %v1169 = vadd.f32 %v1089, %v1153
        %v1170 = vadd.f32 %v1090, %v1154
        %v1171 = vadd.f32 %v1091, %v1155
        %v1172 = vadd.f32 %v1092, %v1156
        %v1173 = vadd.f32 %v1109, %v1141
        %v1174 = vadd.f32 %v1110, %v1142
        %v1175 = vadd.f32 %v1111, %v1143
        %v1176 = vadd.f32 %v1112, %v1144
        %v1177 = vadd.f32 %v1113, %v1145
        %v1178 = vadd.f32 %v1114, %v1146
        %v1179 = vadd.f32 %v1115, %v1147
        %v1180 = vadd.f32 %v1116, %v1148
        %v1181 = vadd.f32 %v1117, %v1149
        %v1182 = vadd.f32 %v1118, %v1150
        %v1183 = vadd.f32 %v1119, %v1151
        %v1184 = vadd.f32 %v1120, %v1152
        %v1185 = vadd.f32 %v1121, %v1153
        %v1186 = vadd.f32 %v1122, %v1154
        %v1187 = vadd.f32 %v1123, %v1155
        %v1188 = vadd.f32 %v1124, %v1156
        %v1189 = vsub.f32 %v1157, %v1093
        %v1190 = vsub.f32 %v1158, %v1094
        %v1191 = vsub.f32 %v1159, %v1095
        %v1192 = vsub.f32 %v1160, %v1096
        %v1193 = vsub.f32 %v1161, %v1097
        %v1194 = vsub.f32 %v1162, %v1098
        %v1195 = vsub.f32 %v1163, %v1099
        %v1196 = vsub.f32 %v1164, %v1100
        %v1197 = vsub.f32 %v1165, %v1101
        %v1198 = vsub.f32 %v1166, %v1102
        %v1199 = vsub.f32 %v1167, %v1103
        %v1200 = vsub.f32 %v1168, %v1104
        %v1201 = vsub.f32 %v1169, %v1105
        %v1202 = vsub.f32 %v1170, %v1106
        %v1203 = vsub.f32 %v1171, %v1107
        %v1204 = vsub.f32 %v1172, %v1108
        %v1205 = vsub.f32 %v1157, %v1125
        %v1206 = vsub.f32 %v1158, %v1126
        %v1207 = vsub.f32 %v1159, %v1127
        %v1208 = vsub.f32 %v1160, %v1128
        %v1209 = vsub.f32 %v1161, %v1129
        %v1210 = vsub.f32 %v1162, %v1130
        %v1211 = vsub.f32 %v1163, %v1131
        %v1212 = vsub.f32 %v1164, %v1132
        %v1213 = vsub.f32 %v1165, %v1133
        %v1214 = vsub.f32 %v1166, %v1134
        %v1215 = vsub.f32 %v1167, %v1135
        %v1216 = vsub.f32 %v1168, %v1136
        %v1217 = vsub.f32 %v1169, %v1137
        %v1218 = vsub.f32 %v1170, %v1138
        %v1219 = vsub.f32 %v1171, %v1139
        %v1220 = vsub.f32 %v1172, %v1140
        %v1221 = vsub.f32 %v1173, %v1093
        %v1222 = vsub.f32 %v1174, %v1094
        %v1223 = vsub.f32 %v1175, %v1095
        %v1224 = vsub.f32 %v1176, %v1096
        %v1225 = vsub.f32 %v1177, %v1097
        %v1226 = vsub.f32 %v1178, %v1098
        %v1227 = vsub.f32 %v1179, %v1099
        %v1228 = vsub.f32 %v1180, %v1100
        %v1229 = vsub.f32 %v1181, %v1101
        %v1230 = vsub.f32 %v1182, %v1102
        %v1231 = vsub.f32 %v1183, %v1103
        %v1232 = vsub.f32 %v1184, %v1104
        %v1233 = vsub.f32 %v1185, %v1105
        %v1234 = vsub.f32 %v1186, %v1106
        %v1235 = vsub.f32 %v1187, %v1107
        %v1236 = vsub.f32 %v1188, %v1108
        %v1237 = vsub.f32 %v1173, %v1125
        %v1238 = vsub.f32 %v1174, %v1126
        %v1239 = vsub.f32 %v1175, %v1127
        %v1240 = vsub.f32 %v1176, %v1128
        %v1241 = vsub.f32 %v1177, %v1129
        %v1242 = vsub.f32 %v1178, %v1130
        %v1243 = vsub.f32 %v1179, %v1131
        %v1244 = vsub.f32 %v1180, %v1132
        %v1245 = vsub.f32 %v1181, %v1133
        %v1246 = vsub.f32 %v1182, %v1134
        %v1247 = vsub.f32 %v1183, %v1135
        %v1248 = vsub.f32 %v1184, %v1136
        %v1249 = vsub.f32 %v1185, %v1137
        %v1250 = vsub.f32 %v1186, %v1138
        %v1251 = vsub.f32 %v1187, %v1139
        %v1252 = vsub.f32 %v1188, %v1140
        %v1253 = vsub.f32 %v1109, %v1125
        %v1254 = vsub.f32 %v1110, %v1126
        %v1255 = vsub.f32 %v1111, %v1127
        %v1256 = vsub.f32 %v1112, %v1128
        %v1257 = vsub.f32 %v1113, %v1129
        %v1258 = vsub.f32 %v1114, %v1130
        %v1259 = vsub.f32 %v1115, %v1131
        %v1260 = vsub.f32 %v1116, %v1132
        %v1261 = vsub.f32 %v1117, %v1133
        %v1262 = vsub.f32 %v1118, %v1134
        %v1263 = vsub.f32 %v1119, %v1135
        %v1264 = vsub.f32 %v1120, %v1136
        %v1265 = vsub.f32 %v1121, %v1137
        %v1266 = vsub.f32 %v1122, %v1138
        %v1267 = vsub.f32 %v1123, %v1139
        %v1268 = vsub.f32 %v1124, %v1140
        %v1269 = vadd.f32 %v1189, %v1253
        %v1270 = vadd.f32 %v1190, %v1254
        %v1271 = vadd.f32 %v1191, %v1255
        %v1272 = vadd.f32 %v1192, %v1256
        %v1273 = vadd.f32 %v1193, %v1257
        %v1274 = vadd.f32 %v1194, %v1258
        %v1275 = vadd.f32 %v1195, %v1259
        %v1276 = vadd.f32 %v1196, %v1260
        %v1277 = vadd.f32 %v1197, %v1261
        %v1278 = vadd.f32 %v1198, %v1262
        %v1279 = vadd.f32 %v1199, %v1263
        %v1280 = vadd.f32 %v1200, %v1264
        %v1281 = vadd.f32 %v1201, %v1265
        %v1282 = vadd.f32 %v1202, %v1266
        %v1283 = vadd.f32 %v1203, %v1267
        %v1284 = vadd.f32 %v1204, %v1268
        %v1285 = vand.u32 2147483647, %v1189
        %v1286 = vand.u32 2147483647, %v1190
        %v1287 = vand.u32 2147483647, %v1191
        %v1288 = vand.u32 2147483647, %v1192
        %v1289 = vand.u32 2147483647, %v1193
        %v1290 = vand.u32 2147483647, %v1194
        %v1291 = vand.u32 2147483647, %v1195
        %v1292 = vand.u32 2147483647, %v1196
        %v1293 = vand.u32 2147483647, %v1197
        %v1294 = vand.u32 2147483647, %v1198
        %v1295 = vand.u32 2147483647, %v1199
        %v1296 = vand.u32 2147483647, %v1200
        %v1297 = vand.u32 2147483647, %v1201
        %v1298 = vand.u32 2147483647, %v1202
        %v1299 = vand.u32 2147483647, %v1203
        %v1300 = vand.u32 2147483647, %v1204
        %v1301 = vand.u32 2147483647, %v1205
        %v1302 = vand.u32 2147483647, %v1206
        %v1303 = vand.u32 2147483647, %v1207
        %v1304 = vand.u32 2147483647, %v1208
        %v1305 = vand.u32 2147483647, %v1209
        %v1306 = vand.u32 2147483647, %v1210
        %v1307 = vand.u32 2147483647, %v1211
        %v1308 = vand.u32 2147483647, %v1212
        %v1309 = vand.u32 2147483647, %v1213
        %v1310 = vand.u32 2147483647, %v1214
        %v1311 = vand.u32 2147483647, %v1215
        %v1312 = vand.u32 2147483647, %v1216
        %v1313 = vand.u32 2147483647, %v1217
        %v1314 = vand.u32 2147483647, %v1218
        %v1315 = vand.u32 2147483647, %v1219
        %v1316 = vand.u32 2147483647, %v1220
        %v1317 = vadd.f32 %v1285, %v1301
        %v1318 = vadd.f32 %v1286, %v1302
        %v1319 = vadd.f32 %v1287, %v1303
        %v1320 = vadd.f32 %v1288, %v1304
        %v1321 = vadd.f32 %v1289, %v1305
        %v1322 = vadd.f32 %v1290, %v1306
        %v1323 = vadd.f32 %v1291, %v1307
        %v1324 = vadd.f32 %v1292, %v1308
        %v1325 = vadd.f32 %v1293, %v1309
        %v1326 = vadd.f32 %v1294, %v1310
        %v1327 = vadd.f32 %v1295, %v1311
        %v1328 = vadd.f32 %v1296, %v1312
        %v1329 = vadd.f32 %v1297, %v1313
        %v1330 = vadd.f32 %v1298, %v1314
        %v1331 = vadd.f32 %v1299, %v1315
        %v1332 = vadd.f32 %v1300, %v1316
        %v1333 = vand.u32 2147483647, %v1221
        %v1334 = vand.u32 2147483647, %v1222
        %v1335 = vand.u32 2147483647, %v1223
        %v1336 = vand.u32 2147483647, %v1224
        %v1337 = vand.u32 2147483647, %v1225
        %v1338 = vand.u32 2147483647, %v1226
        %v1339 = vand.u32 2147483647, %v1227
        %v1340 = vand.u32 2147483647, %v1228
        %v1341 = vand.u32 2147483647, %v1229
        %v1342 = vand.u32 2147483647, %v1230
        %v1343 = vand.u32 2147483647, %v1231
        %v1344 = vand.u32 2147483647, %v1232
        %v1345 = vand.u32 2147483647, %v1233
        %v1346 = vand.u32 2147483647, %v1234
        %v1347 = vand.u32 2147483647, %v1235
        %v1348 = vand.u32 2147483647, %v1236
        %v1349 = vadd.f32 %v1317, %v1333
        %v1350 = vadd.f32 %v1318, %v1334
        %v1351 = vadd.f32 %v1319, %v1335
        %v1352 = vadd.f32 %v1320, %v1336
        %v1353 = vadd.f32 %v1321, %v1337
        %v1354 = vadd.f32 %v1322, %v1338
        %v1355 = vadd.f32 %v1323, %v1339
        %v1356 = vadd.f32 %v1324, %v1340
        %v1357 = vadd.f32 %v1325, %v1341
        %v1358 = vadd.f32 %v1326, %v1342
        %v1359 = vadd.f32 %v1327, %v1343
        %v1360 = vadd.f32 %v1328, %v1344
        %v1361 = vadd.f32 %v1329, %v1345
        %v1362 = vadd.f32 %v1330, %v1346
        %v1363 = vadd.f32 %v1331, %v1347
        %v1364 = vadd.f32 %v1332, %v1348
        %v1365 = vand.u32 2147483647, %v1237
        %v1366 = vand.u32 2147483647, %v1238
        %v1367 = vand.u32 2147483647, %v1239
        %v1368 = vand.u32 2147483647, %v1240
        %v1369 = vand.u32 2147483647, %v1241
        %v1370 = vand.u32 2147483647, %v1242
        %v1371 = vand.u32 2147483647, %v1243
        %v1372 = vand.u32 2147483647, %v1244
        %v1373 = vand.u32 2147483647, %v1245
        %v1374 = vand.u32 2147483647, %v1246
        %v1375 = vand.u32 2147483647, %v1247
        %v1376 = vand.u32 2147483647, %v1248
        %v1377 = vand.u32 2147483647, %v1249
        %v1378 = vand.u32 2147483647, %v1250
        %v1379 = vand.u32 2147483647, %v1251
        %v1380 = vand.u32 2147483647, %v1252
        %v1381 = vadd.f32 %v1349, %v1365
        %v1382 = vadd.f32 %v1350, %v1366
        %v1383 = vadd.f32 %v1351, %v1367
        %v1384 = vadd.f32 %v1352, %v1368
        %v1385 = vadd.f32 %v1353, %v1369
        %v1386 = vadd.f32 %v1354, %v1370
        %v1387 = vadd.f32 %v1355, %v1371
        %v1388 = vadd.f32 %v1356, %v1372
        %v1389 = vadd.f32 %v1357, %v1373
        %v1390 = vadd.f32 %v1358, %v1374
        %v1391 = vadd.f32 %v1359, %v1375
        %v1392 = vadd.f32 %v1360, %v1376
        %v1393 = vadd.f32 %v1361, %v1377
        %v1394 = vadd.f32 %v1362, %v1378
        %v1395 = vadd.f32 %v1363, %v1379
        %v1396 = vadd.f32 %v1364, %v1380
        %v1397 = vand.u32 2147483647, %v1269
        %v1398 = vand.u32 2147483647, %v1270
        %v1399 = vand.u32 2147483647, %v1271
        %v1400 = vand.u32 2147483647, %v1272
        %v1401 = vand.u32 2147483647, %v1273
        %v1402 = vand.u32 2147483647, %v1274
        %v1403 = vand.u32 2147483647, %v1275
        %v1404 = vand.u32 2147483647, %v1276
        %v1405 = vand.u32 2147483647, %v1277
        %v1406 = vand.u32 2147483647, %v1278
        %v1407 = vand.u32 2147483647, %v1279
        %v1408 = vand.u32 2147483647, %v1280
        %v1409 = vand.u32 2147483647, %v1281
        %v1410 = vand.u32 2147483647, %v1282
        %v1411 = vand.u32 2147483647, %v1283
        %v1412 = vand.u32 2147483647, %v1284
        %v1413 = vadd.f32 %v1381, %v1397
        %v1414 = vadd.f32 %v1382, %v1398
        %v1415 = vadd.f32 %v1383, %v1399
        %v1416 = vadd.f32 %v1384, %v1400
        %v1417 = vadd.f32 %v1385, %v1401
        %v1418 = vadd.f32 %v1386, %v1402
        %v1419 = vadd.f32 %v1387, %v1403
        %v1420 = vadd.f32 %v1388, %v1404
        %v1421 = vadd.f32 %v1389, %v1405
        %v1422 = vadd.f32 %v1390, %v1406
        %v1423 = vadd.f32 %v1391, %v1407
        %v1424 = vadd.f32 %v1392, %v1408
        %v1425 = vadd.f32 %v1393, %v1409
        %v1426 = vadd.f32 %v1394, %v1410
        %v1427 = vadd.f32 %v1395, %v1411
        %v1428 = vadd.f32 %v1396, %v1412
        %v1429 = vadd.f32 %v1413, %v1414
        %v1430 = vadd.f32 %v1429, %v1415
        %v1431 = vadd.f32 %v1430, %v1416
        %1432 = vadd.xlane.f32.xlu0 %v1431
        %v1433 = vpop.xlane.xlu0 %1432
        %v1434 = vadd.f32 %v1417, %v1418
        %v1435 = vadd.f32 %v1434, %v1419
        %v1436 = vadd.f32 %v1435, %v1420
        %1437 = vadd.xlane.f32.xlu0 %v1436
        %v1438 = vpop.xlane.xlu0 %1437
        %v1439 = vadd.f32 %v1421, %v1422
        %v1440 = vadd.f32 %v1439, %v1423
        %v1441 = vadd.f32 %v1440, %v1424
        %1442 = vadd.xlane.f32.xlu0 %v1441
        %v1443 = vpop.xlane.xlu0 %1442
        %v1444 = vadd.f32 %v1425, %v1426
        %v1445 = vadd.f32 %v1444, %v1427
        %v1446 = vadd.f32 %v1445, %v1428
        %1447 = vadd.xlane.f32.xlu0 %v1446
        %v1448 = vpop.xlane.xlu0 %1447
        %v1449 = vsub.f32 %v1061, %v1433
        %v1450 = vsub.f32 %v1066, %v1438
        %v1451 = vsub.f32 %v1071, %v1443
        %v1452 = vsub.f32 %v1076, %v1448
        %v1453 = vadd.f32 %v1449, 10.0
        %v1454 = vadd.f32 %v1450, 10.0
        %v1455 = vadd.f32 %v1451, 10.0
        %v1456 = vadd.f32 %v1452, 10.0
        %v1457 = vmax.f32 %v1453, 0.0
        %v1458 = vmax.f32 %v1454, 0.0
        %v1459 = vmax.f32 %v1455, 0.0
        %v1460 = vmax.f32 %v1456, 0.0
        %vm1461 = vcmask 7168
        %1462 = vst.msk [vmem:[%s702] sm:$0xff] %vm1461, %v1457
        %1463 = vst.msk [vmem:[%s702 + $0x8] sm:$0xff] %vm1461, %v1458
        %1464 = vst.msk [vmem:[%s702 + $0x10] sm:$0xff] %vm1461, %v1459
        %1465 = vst.msk [vmem:[%s702 + $0x18] sm:$0xff] %vm1461, %v1460
        %s1466 = sadd.s32 %s38, %s37
        %s1467 = smul.u32 4, %s1466
        %p1468 = scmp.lt.s32.totalorder %s1467, 7
        %s1469 = scalar_select %p1468, %s1467, 7
        %s1470 = smul.addr %s1469, 8
        %s1471 = scalar_lea.vmem %s10, %s1470
        // Predicated region
        $region101: #{tpu_custom_call.1} parent=59 // pred_check
          %p1472 = pneg %p335
        $region102: #{tpu_custom_call.1} parent=59 // pred_check_branch
          %1474 = sbr.rel (%p1472) target = $region104
        $region103: #{tpu_custom_call.1} parent=59 // pred_region
          %s1475 = sadd.s32 %s38, %s37
          %s1476 = smul.u32 4, %s1475
        $region104: #{tpu_custom_call.1} parent=59 // pred_fallthru
          _
      $region60: #{tpu_custom_call.1} parent=5 // pred_fallthru
        _
      %p1477 = scmp.le.s32.totalorder 2, %s28
      // Predicated region
      $region105: #{tpu_custom_call.1} parent=5 // pred_check
        %p1478 = pneg %p1477
      $region106: #{tpu_custom_call.1} parent=5 // pred_check_branch
        %1480 = sbr.rel (%p1478) target = $region108
      $region107: #{tpu_custom_call.1} parent=5 // pred_region
        %s1481 = ssub.s32 %s28, 2
        // Predicated region
        $region109: #{tpu_custom_call.1} parent=107 // pred_check
          %p1482 = pneg %p341
        $region110: #{tpu_custom_call.1} parent=107 // pred_check_branch
          %1484 = sbr.rel (%p1482) target = $region112
        $region111: #{tpu_custom_call.1} parent=107 // pred_region
          %s1485 = sadd.s32 %s40, %s39
          %s1486 = smul.u32 4, %s1485
          %p1487 = scmp.lt.s32.totalorder %s1486, 7
          %s1488 = scalar_select %p1487, %s1486, 7
          %s1489 = smul.addr %s1488, 8
          %s1490 = scalar_lea.vmem %s10, %s1489
        $region112: #{tpu_custom_call.1} parent=107 // pred_fallthru
          _
      $region108: #{tpu_custom_call.1} parent=5 // pred_fallthru
        _
    $region6: #{tpu_custom_call.1} parent=1 // loop_footer
      %s32 = sadd.s32 1, %s28
    $region7: #{tpu_custom_call.1} parent=1 // loop_footer_branch
      %27 = sbr.rel target = $region3
    $region8: #{tpu_custom_call.1} parent=1 // loop_exit
      _
    %1491 = vsyncpa [#allocation3], 1
    %s1492 = scalar_lea.sflag [#allocation3], 1
    %1493 = vsyncpa %s1492, 1
    %1494 = vsyncpa [#allocation5], 1
    %1495 = vsyncpa [#allocation8], 1
    %1496 = vsyncpa [#allocation11], 1
    %s1497 = scalar_lea.sflag [#allocation11], 1
    %1498 = vsyncpa %s1497, 1
    %1499 = vsyncpa [#allocation14], 1
    %s1500 = scalar_lea.sflag [#allocation14], 1
    %1501 = vsyncpa %s1500, 1
    %1502 = vsyncpa [#allocation17], 1
    %s1503 = scalar_lea.sflag [#allocation17], 1
    %1504 = vsyncpa %s1503, 1

</llo_original>
